<compile_context>
chip_gen: v7x
topology: tpu7x:2x2x1
jax: 0.10.0
libtpu: 0.0.40
codegen_flags: <defaults>
</compile_context>

<pallas_src>
import functools
import math

import numpy as np
import jax
import jax.numpy as jnp
from jax.experimental import pallas as pl
from jax.experimental.pallas import tpu as pltpu

LN_EPS = 1e-5
RMS_EPS = 1e-6


# ---------------------------------------------------------------------------
# generation-aware knobs
# ---------------------------------------------------------------------------
def _device_kind():
    try:
        return jax.devices()[0].device_kind.lower()
    except Exception:
        return ""


def _vmem_limit_bytes():
    kind = _device_kind()
    if "v7" in kind or "7x" in kind:
        # v7x has 64 MiB physical per TC; leave headroom for Mosaic scratch/DMA.
        return 56 * 1024 * 1024
    if any(t in kind for t in ("v4", "v5", "v6")):
        # 128 MiB-class chips: let resident weights / larger seq tiles fit.
        return 100 * 1024 * 1024
    return 64 * 1024 * 1024


def _exp_in_bf16():
    # bf16 EUP path exists on v6e/v7x but NOT on v5e.
    kind = _device_kind()
    return ("v6" in kind) or ("v7" in kind) or ("7x" in kind)


@functools.lru_cache(maxsize=1)
def _supports_single_buffering():
    """Tiny isolated probe: does this jax build accept pl.Buffered(1)?"""
    def _probe_kernel(x_ref, o_ref):
        o_ref[...] = x_ref[...] + 1.0

    try:
        x = jnp.zeros((8, 128), jnp.float32)
        y = pl.pallas_call(
            _probe_kernel,
            out_shape=jax.ShapeDtypeStruct((16, 128), jnp.float32),
            grid=(2,),
            in_specs=[pl.BlockSpec((8, 128), lambda i: (0, 0),
                                   pipeline_mode=pl.Buffered(1))],
            out_specs=pl.BlockSpec((8, 128), lambda i: (i, 0)),
        )(x)
        jax.block_until_ready(y)
        return True
    except Exception:
        # Probe-only scope: failure just disables single-buffering of weights.
        return False


# ---------------------------------------------------------------------------
# small in-kernel helpers
# ---------------------------------------------------------------------------
def _layer_norm(x, w, b):
    mu = jnp.mean(x, axis=-1, keepdims=True)
    var = jnp.mean((x - mu) ** 2, axis=-1, keepdims=True)
    return (x - mu) * jax.lax.rsqrt(var + LN_EPS) * w + b


def _rms_norm(x, w):
    var = jnp.mean(x * x, axis=-1, keepdims=True)
    return x * jax.lax.rsqrt(var + RMS_EPS) * w


# -------------- kernel 1: adaLN-zero modulation + fused QKV + RoPE ----------
def _qkv_kernel(hid_ref, shift1_ref, scale1_ref, cosh_ref, sinh_ref,
                ln1w_ref, ln1b_ref, wqkv_ref, bqkv_ref,
                rmsq_ref, rmsk_ref,
                q_out_ref, k_out_ref, v_out_ref, *, d_model, half_d, q_scale):
    x = hid_ref[0]                                            # [TS, D] f32
    h1 = (_layer_norm(x, ln1w_ref[...], ln1b_ref[...])
          * (1.0 + scale1_ref[0]) + shift1_ref[0])
    h1b = h1.astype(jnp.bfloat16)                             # bf16 MXU operand
    # one MXU stream for q|k|v
    qkv = jnp.dot(h1b, wqkv_ref[...],
                  preferred_element_type=jnp.float32) + bqkv_ref[...]
    q = qkv[:, :d_model]
    k = qkv[:, d_model:2 * d_model]
    v = qkv[:, 2 * d_model:]
    q = _rms_norm(q, rmsq_ref[...])                           # rms_norm_across_heads
    k = _rms_norm(k, rmsk_ref[...])

    # RoPE: q/k columns were permuted (wrapper) to [all reals | all imags], so
    # the rotation partner of every lane is exactly D/2 lanes away -> one XLU
    # roll.  Full-width cos/sin tables are built in-kernel from [TS, D/2] halves
    # (no [S, D] f32 tables in HBM/VMEM).
    ch = cosh_ref[...].astype(jnp.float32)                    # [TS, D/2]
    sh = sinh_ref[...].astype(jnp.float32)
    cos_d = jnp.concatenate([ch, ch], axis=1)                 # [TS, D]
    sin_d = jnp.concatenate([-sh, sh], axis=1)                # [TS, D]
    q = q * cos_d + pltpu.roll(q, half_d, axis=1) * sin_d
    k = k * cos_d + pltpu.roll(k, half_d, axis=1) * sin_d

    # fold 1/sqrt(Dh) into q once so the flash kernel does no per-chunk scale.
    q_out_ref[0] = (q * q_scale).astype(q_out_ref.dtype)
    k_out_ref[0] = k.astype(k_out_ref.dtype)
    v_out_ref[0] = v.astype(v_out_ref.dtype)


# -------------- kernel 2: flash attention, K/V resident per (b, h) ----------
def _flash_kernel(q_ref, k_ref, v_ref, o_ref, *, kv_tile, exp_bf16):
    s_total = k_ref.shape[2]
    n_k = s_total // kv_tile
    q = q_ref[0, 0]                                           # [TQ, Dh] bf16 (pre-scaled)
    q_tile, dh = q.shape

    def body(j, carry):
        m_prev, l_prev, acc_prev = carry
        start = pl.multiple_of(j * kv_tile, kv_tile)
        k = k_ref[0, 0, pl.ds(start, kv_tile), :]             # slice of resident K
        v = v_ref[0, 0, pl.ds(start, kv_tile), :]             # slice of resident V
        s = jax.lax.dot_general(q, k, (((1,), (1,)), ((), ())),
                                preferred_element_type=jnp.float32)
        m_new = jnp.maximum(m_prev, jnp.max(s, axis=-1, keepdims=True))
        alpha = jnp.exp(m_prev - m_new)
        if exp_bf16:                                          # v6e / v7x EUP
            p = jnp.exp((s - m_new).astype(jnp.bfloat16))
        else:                                                 # v5e: f32 EUP only
            p = jnp.exp(s - m_new).astype(jnp.bfloat16)
        l_new = alpha * l_prev + jnp.sum(p, axis=-1, keepdims=True,
                                         dtype=jnp.float32)
        acc_new = alpha * acc_prev + jnp.dot(p, v,
                                             preferred_element_type=jnp.float32)
        return m_new, l_new, acc_new

    m0 = jnp.full((q_tile, 1), -jnp.inf, jnp.float32)
    l0 = jnp.zeros((q_tile, 1), jnp.float32)
    a0 = jnp.zeros((q_tile, dh), jnp.float32)
    m, l, acc = jax.lax.fori_loop(0, n_k, body, (m0, l0, a0))
    o_ref[0, 0] = (acc * pl.reciprocal(l, approx=True)).astype(o_ref.dtype)


# ------ kernel 3: output projection + residual + adaLN-zero + tiled FFN -----
def _out_ffn_kernel(hid_ref, attn_ref, gate1_ref, shift2_ref, scale2_ref,
                    gate2_ref, ln2w_ref, ln2b_ref, wo_ref, bo_ref,
                    wf1_ref, bf1_ref, wf2_ref, bf2_ref,
                    out_ref, xnew_sc, h2_sc, acc_sc):
    ffi = pl.program_id(2)

    @pl.when(ffi == 0)
    def _():
        attn = jnp.dot(attn_ref[0], wo_ref[...],
                       preferred_element_type=jnp.float32) + bo_ref[...]
        xnew = hid_ref[0] + gate1_ref[0] * attn
        xnew_sc[...] = xnew
        h2 = (_layer_norm(xnew, ln2w_ref[...], ln2b_ref[...])
              * (1.0 + scale2_ref[0]) + shift2_ref[0])
        h2_sc[...] = h2.astype(h2_sc.dtype)
        acc_sc[...] = jnp.zeros(acc_sc.shape, dtype=acc_sc.dtype)

    f = jnp.dot(h2_sc[...], wf1_ref[...],
                preferred_element_type=jnp.float32) + bf1_ref[...]
    f = jax.nn.gelu(f, approximate=True)                      # GELU(tanh), f32
    acc_sc[...] += jnp.dot(f.astype(jnp.bfloat16), wf2_ref[...],
                           preferred_element_type=jnp.float32)

    @pl.when(ffi == pl.num_programs(2) - 1)
    def _():
        out_ref[0] = (xnew_sc[...]
                      + gate2_ref[0] * (acc_sc[...] + bf2_ref[...])
                      ).astype(out_ref.dtype)


# ----------------------------------------------------------------------------
# Wrapper
# ----------------------------------------------------------------------------
def _pick_sublane_tile(n, target):
    t = min(n, target)
    while t >= 8:
        if n % t == 0 and t % 8 == 0:
            return t
        t -= 8
    return n


def _pick_lane_tile(n, target):
    t = min(n, target)
    while t >= 128:
        if n % t == 0 and t % 128 == 0:
            return t
        t -= 128
    return n


def _forward(params, hidden, temb, cos, sin, *, num_heads, seq_tile, q_tile,
             kv_tile, ff_tile, ff_seq_tile, single_buffer_weights, exp_bf16,
             vmem_limit):
    f32, bf16 = jnp.float32, jnp.bfloat16
    B, S, D = hidden.shape
    H = num_heads
    Dh = D // H
    Hd2 = Dh // 2
    FF = params["wf1"].shape[1]

    assert D % H == 0 and Dh % 2 == 0
    assert D % 128 == 0, "model dim must be a multiple of the 128-lane width"
    for tile in (seq_tile, q_tile, kv_tile, ff_seq_tile):
        assert S % tile == 0 and (tile % 8 == 0 or tile == S)
    assert FF % ff_tile == 0 and (ff_tile % 128 == 0 or ff_tile == FF)

    # within-model permutation for q/k columns: interleaved (r,i) pairs ->
    # [all reals | all imags]; invariant under across-heads RMS norm & q.k dots.
    h_idx = np.repeat(np.arange(H), Hd2)
    j_idx = np.tile(np.arange(Hd2), H)
    reals = h_idx * Dh + 2 * j_idx
    perm = np.concatenate([reals, reals + 1]).astype(np.int32)
    perm = jnp.asarray(perm)

    # fused QKV weight / bias (q and k columns permuted)
    wqkv = jnp.concatenate(
        [params["wq"][:, perm], params["wk"][:, perm], params["wv"]],
        axis=1).astype(bf16)                                             # [D, 3D]
    bqkv = jnp.concatenate(
        [params["bq"][perm], params["bk"][perm], params["bv"]]
    ).reshape(1, 3 * D).astype(f32)

    wo = params["wo"].astype(bf16)
    wf1 = params["wf1"].astype(bf16)
    wf2 = params["wf2"].astype(bf16)

    rmsq = params["rmsq_w"][perm].reshape(1, D).astype(f32)
    rmsk = params["rmsk_w"][perm].reshape(1, D).astype(f32)
    bo = params["bo"].reshape(1, D).astype(f32)
    bf1 = params["bf1"].reshape(1, FF).astype(f32)
    bf2 = params["bf2"].reshape(1, D).astype(f32)
    ln1w = params["ln1_w"].reshape(1, D).astype(f32)
    ln1b = params["ln1_b"].reshape(1, D).astype(f32)
    ln2w = params["ln2_w"].reshape(1, D).astype(f32)
    ln2b = params["ln2_b"].reshape(1, D).astype(f32)

    # adaLN-zero conditioning: tiny [B,T]x[T,3D] matmuls, done in plain JAX so
    # the (T x 3D) weights never enter VMEM.
    t_act = jax.nn.silu(temb.astype(f32))
    cond1 = t_act @ params["w_n1"] + params["b_n1"]
    cond2 = t_act @ params["w_n2"] + params["b_n2"]
    shift1, scale1, gate1 = [c[:, None, :] for c in jnp.split(cond1, 3, axis=-1)]
    shift2, scale2, gate2 = [c[:, None, :] for c in jnp.split(cond2, 3, axis=-1)]

    # RoPE half-tables ([S, D/2] bf16, full width built in-kernel).
    cos_h = jnp.tile(cos.astype(f32), (1, H)).astype(bf16)               # [S, D/2]
    sin_h = jnp.tile(sin.astype(f32), (1, H)).astype(bf16)               # [S, D/2]

    def inv_spec(shape):
        imap = lambda *_: (0,) * len(shape)
        if single_buffer_weights:
            # grid-invariant weights: single buffer -> halve weight VMEM footprint
            return pl.BlockSpec(shape, imap, pipeline_mode=pl.Buffered(1))
        return pl.BlockSpec(shape, imap)

    # ----------------- kernel 1: modulation + QKV + RoPE ----------------------
    n_s = S // seq_tile
    row_spec = pl.BlockSpec((1, seq_tile, D), lambda b, s: (b, s, 0))
    cond_spec1 = pl.BlockSpec((1, 1, D), lambda b, s: (b, 0, 0))
    rope_spec = pl.BlockSpec((seq_tile, D // 2), lambda b, s: (s, 0))

    qkv_cost = pl.CostEstimate(
        flops=int(6 * B * S * D * D),
        transcendentals=int(4 * B * S),
        bytes_accessed=int(4 * B * S * D + 6 * B * S * D + 6 * D * D))

    q_flat, k_flat, v_flat = pl.pallas_call(
        functools.partial(_qkv_kernel, d_model=D, half_d=D // 2,
                          q_scale=1.0 / math.sqrt(Dh)),
        out_shape=(jax.ShapeDtypeStruct((B, S, D), bf16),) * 3,
        grid_spec=pltpu.PrefetchScalarGridSpec(
            num_scalar_prefetch=0,
            grid=(B, n_s),
            in_specs=[row_spec, cond_spec1, cond_spec1, rope_spec, rope_spec,
                      inv_spec((1, D)), inv_spec((1, D)),
                      inv_spec((D, 3 * D)), inv_spec((1, 3 * D)),
                      inv_spec((1, D)), inv_spec((1, D))],
            out_specs=(row_spec, row_spec, row_spec)),
        compiler_params=pltpu.CompilerParams(
            dimension_semantics=("parallel", "parallel"),
            vmem_limit_bytes=vmem_limit),
        cost_estimate=qkv_cost,
    )(hidden, shift1, scale1, cos_h, sin_h, ln1w, ln1b, wqkv, bqkv, rmsq, rmsk)

    # --------------------- kernel 2: flash attention --------------------------
    # head-major relayout for q/k (de-interleave) and v, done once in XLA glue.
    # TODO(synk): fold the v/o relayouts into BlockSpecs once sub-(8,128)
    # second-minor blocks are supported; q/k need the de-interleave regardless.
    q_hm = q_flat.reshape(B, S, 2, H, Hd2).transpose(0, 3, 1, 2, 4).reshape(B, H, S, Dh)
    k_hm = k_flat.reshape(B, S, 2, H, Hd2).transpose(0, 3, 1, 2, 4).reshape(B, H, S, Dh)
    v_hm = v_flat.reshape(B, S, H, Dh).transpose(0, 2, 1, 3)

    n_q = S // q_tile
    q_spec = pl.BlockSpec((1, 1, q_tile, Dh), lambda b, h, qi: (b, h, qi, 0))
    # full-S K/V blocks: index map constant in qi -> fetched once per (b, h).
    kv_spec = pl.BlockSpec((1, 1, S, Dh), lambda b, h, qi: (b, h, 0, 0))

    flash_cost = pl.CostEstimate(
        flops=int(4 * B * H * S * S * Dh),
        transcendentals=int(B * H * S * S),
        bytes_accessed=int(8 * B * S * D))

    o_hm = pl.pallas_call(
        functools.partial(_flash_kernel, kv_tile=kv_tile, exp_bf16=exp_bf16),
        out_shape=jax.ShapeDtypeStruct((B, H, S, Dh), bf16),
        grid_spec=pltpu.PrefetchScalarGridSpec(
            num_scalar_prefetch=0,
            grid=(B, H, n_q),
            in_specs=[q_spec, kv_spec, kv_spec],
            out_specs=q_spec),
        compiler_params=pltpu.CompilerParams(
            dimension_semantics=("parallel", "parallel", "arbitrary"),
            vmem_limit_bytes=vmem_limit),
        cost_estimate=flash_cost,
    )(q_hm, k_hm, v_hm)

    attn_flat = o_hm.transpose(0, 2, 1, 3).reshape(B, S, D)   # back to [B, S, D]

    # ---------- kernel 3: out-proj + residual + adaLN + FF-tiled FFN ----------
    n_sf = S // ff_seq_tile
    n_f = FF // ff_tile
    row3 = pl.BlockSpec((1, ff_seq_tile, D), lambda b, s, f: (b, s, 0))
    cond3 = pl.BlockSpec((1, 1, D), lambda b, s, f: (b, 0, 0))
    wf1_spec = pl.BlockSpec((D, ff_tile), lambda b, s, f: (0, f))
    bf1_spec = pl.BlockSpec((1, ff_tile), lambda b, s, f: (0, f))
    wf2_spec = pl.BlockSpec((ff_tile, D), lambda b, s, f: (f, 0))

    ffn_cost = pl.CostEstimate(
        flops=int(2 * B * S * D * D + 4 * B * S * D * FF),
        transcendentals=int(B * S * FF),
        bytes_accessed=int(12 * B * S * D + 2 * (D * D + 2 * D * FF)))

    out = pl.pallas_call(
        _out_ffn_kernel,
        out_shape=jax.ShapeDtypeStruct((B, S, D), hidden.dtype),
        grid_spec=pltpu.PrefetchScalarGridSpec(
            num_scalar_prefetch=0,
            grid=(B, n_sf, n_f),
            in_specs=[row3, row3, cond3, cond3, cond3, cond3,
                      inv_spec((1, D)), inv_spec((1, D)),
                      inv_spec((D, D)), inv_spec((1, D)),
                      wf1_spec, bf1_spec, wf2_spec, inv_spec((1, D))],
            out_specs=row3,
            scratch_shapes=[pltpu.VMEM((ff_seq_tile, D), jnp.float32),
                            pltpu.VMEM((ff_seq_tile, D), jnp.bfloat16),
                            pltpu.VMEM((ff_seq_tile, D), jnp.float32)]),
        compiler_params=pltpu.CompilerParams(
            dimension_semantics=("parallel", "parallel", "arbitrary"),
            vmem_limit_bytes=vmem_limit),
        cost_estimate=ffn_cost,
    )(hidden, attn_flat, gate1, shift2, scale2, gate2,
      ln2w, ln2b, wo, bo, wf1, bf1, wf2, bf2)

    return out


def single_attention_block(params, hidden, temb, cos, sin, *, num_heads,
                           seq_tile=None, q_tile=None, kv_tile=None,
                           ff_tile=None, ff_seq_tile=None):
    _, S, _ = hidden.shape
    FF = params["wf1"].shape[1]
    kind = _device_kind()
    is_v7 = ("v7" in kind) or ("7x" in kind)
    # kernel-3 seq tile sized so wf1/wf2 streaming stays above the MXU/HBM
    # break-even (~640 flops/byte v6e, ~310 v7x, ~240 v5e).
    ff_seq_target = 384 if is_v7 else 640
    kw = dict(num_heads=num_heads,
              seq_tile=seq_tile or _pick_sublane_tile(S, 256),
              q_tile=q_tile or _pick_sublane_tile(S, 256),
              kv_tile=kv_tile or _pick_sublane_tile(S, 512),
              ff_tile=ff_tile or _pick_lane_tile(FF, 512),
              ff_seq_tile=ff_seq_tile or _pick_sublane_tile(S, ff_seq_target))
    return _forward(params, hidden, temb, cos, sin,
                    single_buffer_weights=_supports_single_buffering(),
                    exp_bf16=_exp_in_bf16(),
                    vmem_limit=_vmem_limit_bytes(), **kw)


# ----------------------------------------------------------------------------
# Pure-JAX reference (mirrors the PyTorch forward exactly, fp32)
# ----------------------------------------------------------------------------
def reference(params, hidden, temb, cos, sin, *, num_heads,
              ln_eps=1e-5, rms_eps=1e-6):
    B, S, D = hidden.shape
    H = num_heads
    Dh = D // H

    def ln(x, w, b):
        mu = x.mean(-1, keepdims=True)
        var = ((x - mu) ** 2).mean(-1, keepdims=True)
        return (x - mu) * jax.lax.rsqrt(var + ln_eps) * w + b

    def rms(x, w):
        var = (x * x).mean(-1, keepdims=True)
        return x * jax.lax.rsqrt(var + rms_eps) * w

    def cond(w, b):
        c = jax.nn.silu(temb) @ w + b
        return jnp.split(c, 3, axis=-1)

    def rope(x):                               # [B, H, S, Dh], interleaved pairs
        xe = x[..., 0::2]
        xo = x[..., 1::2]
        ye = xe * cos - xo * sin
        yo = xe * sin + xo * cos
        return jnp.stack([ye, yo], axis=-1).reshape(x.shape)

    shift1, scale1, gate1 = cond(params["w_n1"], params["b_n1"])
    h1 = (ln(hidden, params["ln1_w"], params["ln1_b"]) * (1 + scale1[:, None, :])
          + shift1[:, None, :])

    q = h1 @ params["wq"] + params["bq"]
    k = h1 @ params["wk"] + params["bk"]
    v = h1 @ params["wv"] + params["bv"]
    q = rms(q, params["rmsq_w"])
    k = rms(k, params["rmsk_w"])
    q = q.reshape(B, S, H, Dh).transpose(0, 2, 1, 3)
    k = k.reshape(B, S, H, Dh).transpose(0, 2, 1, 3)
    v = v.reshape(B, S, H, Dh).transpose(0, 2, 1, 3)
    q = rope(q)
    k = rope(k)
    s = jnp.einsum("bhsd,bhtd->bhst", q, k) / math.sqrt(Dh)
    p = jax.nn.softmax(s, axis=-1)
    o = jnp.einsum("bhst,bhtd->bhsd", p, v)
    o = o.transpose(0, 2, 1, 3).reshape(B, S, D)
    attn = o @ params["wo"] + params["bo"]
    hidden = hidden + gate1[:, None, :] * attn

    shift2, scale2, gate2 = cond(params["w_n2"], params["b_n2"])
    h2 = (ln(hidden, params["ln2_w"], params["ln2_b"]) * (1 + scale2[:, None, :])
          + shift2[:, None, :])
    f = jax.nn.gelu(h2 @ params["wf1"] + params["bf1"], approximate=True)
    f = f @ params["wf2"] + params["bf2"]
    return hidden + gate2[:, None, :] * f


# ----------------------------------------------------------------------------
if __name__ == "__main__":
    B, S, D, H, T, FF = 2, 32, 128, 4, 64, 256     # dim=128, heads=4, head_dim=32
    Dh = D // H

    key = jax.random.PRNGKey(0)
    ks = jax.random.split(key, 32)

    def rnd(i, shape, s=0.02):
        return jax.random.normal(ks[i], shape, jnp.float32) * s

    params = dict(
        w_n1=rnd(0, (T, 3 * D)), b_n1=rnd(1, (3 * D,), 0.01),
        ln1_w=1.0 + rnd(2, (D,), 0.05), ln1_b=rnd(3, (D,), 0.01),
        w_n2=rnd(4, (T, 3 * D)), b_n2=rnd(5, (3 * D,), 0.01),
        ln2_w=1.0 + rnd(6, (D,), 0.05), ln2_b=rnd(7, (D,), 0.01),
        wq=rnd(8, (D, D)), bq=rnd(9, (D,), 0.01),
        wk=rnd(10, (D, D)), bk=rnd(11, (D,), 0.01),
        wv=rnd(12, (D, D)), bv=rnd(13, (D,), 0.01),
        rmsq_w=1.0 + rnd(14, (D,), 0.05), rmsk_w=1.0 + rnd(15, (D,), 0.05),
        wo=rnd(16, (D, D)), bo=rnd(17, (D,), 0.01),
        wf1=rnd(18, (D, FF)), bf1=rnd(19, (FF,), 0.01),
        wf2=rnd(20, (FF, D)), bf2=rnd(21, (D,), 0.01),
    )

    hidden = jax.random.normal(ks[22], (B, S, D), jnp.float32)
    temb = jax.random.normal(ks[23], (B, T), jnp.float32)

    # rotary_emb = cos + i*sin over (position, head_dim/2)
    pos = jnp.arange(S, dtype=jnp.float32)[:, None]
    inv_freq = 1.0 / (10000.0 ** (jnp.arange(Dh // 2, dtype=jnp.float32) / (Dh // 2)))
    ang = pos * inv_freq[None, :]
    cos, sin = jnp.cos(ang), jnp.sin(ang)          # [S, Dh//2]

    # small tiles so the multi-tile paths (in-kernel kv loop, multiple q tiles,
    # FF accumulation, multiple seq tiles) are exercised even at toy sizes.
    out = single_attention_block(params, hidden, temb, cos, sin, num_heads=H,
                                 seq_tile=16, q_tile=16, kv_tile=16,
                                 ff_tile=128, ff_seq_tile=16)
    out = jax.block_until_ready(out)

    ref = reference(params, hidden, temb, cos, sin, num_heads=H)
    err = float(jnp.max(jnp.abs(out - ref)))
    assert err < 3e-2, f"kernel/reference mismatch: max abs err = {err}"
    print("KERNEL_OK")
</pallas_src>

<mosaic_0001>
module attributes {stable_mosaic.version = 11 : i64} {
  func.func @_probe_kernel(%arg0: i32, %arg1: memref<8x128xf32, #tpu.memory_space<vmem>>, %arg2: memref<8x128xf32, #tpu.memory_space<vmem>>) attributes {dimension_semantics = [#tpu.dimension_semantics<arbitrary>], iteration_bounds = array<i64: 2>, scalar_prefetch = 0 : i64, scratch_operands = 0 : i64, tpu.core_type = #tpu.core_type<tc>, window_params = [{pipeline_mode = #tpu.pipeline_mode<synchronous>, transform_indices = @transform_0, window_bounds = array<i64: 8, 128>}, {transform_indices = @transform_1, window_bounds = array<i64: 8, 128>}]} {
    %c0 = arith.constant 0 : index
    %c0_0 = arith.constant 0 : index
    %0 = vector.load %arg1[%c0, %c0_0] : memref<8x128xf32, #tpu.memory_space<vmem>>, vector<8x128xf32>
    %cst = arith.constant 1.000000e+00 : f32
    %1 = vector.broadcast %cst : f32 to vector<8x128xf32>
    %2 = arith.addf %0, %1 : vector<8x128xf32>
    %c0_1 = arith.constant 0 : index
    %c0_2 = arith.constant 0 : index
    %3 = vector.load %arg2[%c0_1, %c0_2] : memref<8x128xf32, #tpu.memory_space<vmem>>, vector<8x128xf32>
    tpu.vector_store %arg2[%c0_1, %c0_2], %2 {strides = array<i32>} : memref<8x128xf32, #tpu.memory_space<vmem>>, vector<8x128xf32>,
    return
  }
  func.func @transform_0(%arg0: i32) -> (i32, i32) {
    %c0_i32 = arith.constant 0 : i32
    %c0_i32_0 = arith.constant 0 : i32
    %c0_i32_1 = arith.constant 0 : i32
    return %c0_i32, %c0_i32_0 : i32, i32
  }
  func.func @transform_1(%arg0: i32) -> (i32, i32) {
    %c0_i32 = arith.constant 0 : i32
    %c0_i32_0 = arith.constant 0 : i32
    return %arg0, %c0_i32 : i32, i32
  }
}

module attributes {stable_mosaic.version = 11 : i64} {
  func.func @_qkv_kernel(%arg0: i32, %arg1: i32, %arg2: memref<1x16x128xf32, #tpu.memory_space<vmem>>, %arg3: memref<1x1x128xf32, #tpu.memory_space<vmem>>, %arg4: memref<1x1x128xf32, #tpu.memory_space<vmem>>, %arg5: memref<16x64xbf16, #tpu.memory_space<vmem>>, %arg6: memref<16x64xbf16, #tpu.memory_space<vmem>>, %arg7: memref<1x128xf32, #tpu.memory_space<vmem>>, %arg8: memref<1x128xf32, #tpu.memory_space<vmem>>, %arg9: memref<128x384xbf16, #tpu.memory_space<vmem>>, %arg10: memref<1x384xf32, #tpu.memory_space<vmem>>, %arg11: memref<1x128xf32, #tpu.memory_space<vmem>>, %arg12: memref<1x128xf32, #tpu.memory_space<vmem>>, %arg13: memref<1x16x128xbf16, #tpu.memory_space<vmem>>, %arg14: memref<1x16x128xbf16, #tpu.memory_space<vmem>>, %arg15: memref<1x16x128xbf16, #tpu.memory_space<vmem>>) attributes {dimension_semantics = [#tpu.dimension_semantics<parallel>, #tpu.dimension_semantics<parallel>], iteration_bounds = array<i64: 2, 2>, scalar_prefetch = 0 : i64, scratch_operands = 0 : i64, tpu.core_type = #tpu.core_type<tc>, window_params = [{transform_indices = @transform_0, window_bounds = array<i64: 1, 16, 128>}, {transform_indices = @transform_1, window_bounds = array<i64: 1, 1, 128>}, {transform_indices = @transform_2, window_bounds = array<i64: 1, 1, 128>}, {transform_indices = @transform_3, window_bounds = array<i64: 16, 64>}, {transform_indices = @transform_4, window_bounds = array<i64: 16, 64>}, {pipeline_mode = #tpu.pipeline_mode<synchronous>, transform_indices = @transform_5, window_bounds = array<i64: 1, 128>}, {pipeline_mode = #tpu.pipeline_mode<synchronous>, transform_indices = @transform_6, window_bounds = array<i64: 1, 128>}, {pipeline_mode = #tpu.pipeline_mode<synchronous>, transform_indices = @transform_7, window_bounds = array<i64: 128, 384>}, {pipeline_mode = #tpu.pipeline_mode<synchronous>, transform_indices = @transform_8, window_bounds = array<i64: 1, 384>}, {pipeline_mode = #tpu.pipeline_mode<synchronous>, transform_indices = @transform_9, window_bounds = array<i64: 1, 128>}, {pipeline_mode = #tpu.pipeline_mode<synchronous>, transform_indices = @transform_10, window_bounds = array<i64: 1, 128>}, {transform_indices = @transform_11, window_bounds = array<i64: 1, 16, 128>}, {transform_indices = @transform_12, window_bounds = array<i64: 1, 16, 128>}, {transform_indices = @transform_13, window_bounds = array<i64: 1, 16, 128>}]} {
    %c0 = arith.constant 0 : index
    %c0_0 = arith.constant 0 : index
    %c0_1 = arith.constant 0 : index
    %0 = vector.load %arg2[%c0, %c0_0, %c0_1] : memref<1x16x128xf32, #tpu.memory_space<vmem>>, vector<1x16x128xf32>
    %1 = vector.shape_cast %0 : vector<1x16x128xf32> to vector<16x128xf32>
    %c0_2 = arith.constant 0 : index
    %c0_3 = arith.constant 0 : index
    %2 = vector.load %arg7[%c0_2, %c0_3] : memref<1x128xf32, #tpu.memory_space<vmem>>, vector<1x128xf32>
    %c0_4 = arith.constant 0 : index
    %c0_5 = arith.constant 0 : index
    %3 = vector.load %arg8[%c0_4, %c0_5] : memref<1x128xf32, #tpu.memory_space<vmem>>, vector<1x128xf32>
    %cst = arith.constant dense<0.000000e+00> : vector<16xf32>
    %4 = vector.multi_reduction <add>, %1, %cst [1] : vector<16x128xf32> to vector<16xf32>
    %5 = vector.shape_cast %4 : vector<16xf32> to vector<16x1xf32>
    %cst_6 = arith.constant 1.280000e+02 : f32
    %6 = vector.broadcast %cst_6 : f32 to vector<16x1xf32>
    %7 = arith.divf %5, %6 : vector<16x1xf32>
    %8 = vector.broadcast %7 : vector<16x1xf32> to vector<16x128xf32>
    %9 = arith.subf %1, %8 : vector<16x128xf32>
    %10 = arith.mulf %9, %9 : vector<16x128xf32>
    %cst_7 = arith.constant dense<0.000000e+00> : vector<16xf32>
    %11 = vector.multi_reduction <add>, %10, %cst_7 [1] : vector<16x128xf32> to vector<16xf32>
    %12 = vector.shape_cast %11 : vector<16xf32> to vector<16x1xf32>
    %cst_8 = arith.constant 1.280000e+02 : f32
    %13 = vector.broadcast %cst_8 : f32 to vector<16x1xf32>
    %14 = arith.divf %12, %13 : vector<16x1xf32>
    %15 = vector.broadcast %7 : vector<16x1xf32> to vector<16x128xf32>
    %16 = arith.subf %1, %15 : vector<16x128xf32>
    %cst_9 = arith.constant 9.99999974E-6 : f32
    %17 = vector.broadcast %cst_9 : f32 to vector<16x1xf32>
    %18 = arith.addf %14, %17 : vector<16x1xf32>
    %19 = math.rsqrt %18 : vector<16x1xf32>
    %20 = vector.broadcast %19 : vector<16x1xf32> to vector<16x128xf32>
    %21 = arith.mulf %16, %20 : vector<16x128xf32>
    %22 = vector.broadcast %2 : vector<1x128xf32> to vector<16x128xf32>
    %23 = arith.mulf %21, %22 : vector<16x128xf32>
    %24 = vector.broadcast %3 : vector<1x128xf32> to vector<16x128xf32>
    %25 = arith.addf %23, %24 : vector<16x128xf32>
    %c0_10 = arith.constant 0 : index
    %c0_11 = arith.constant 0 : index
    %c0_12 = arith.constant 0 : index
    %26 = vector.load %arg4[%c0_10, %c0_11, %c0_12] : memref<1x1x128xf32, #tpu.memory_space<vmem>>, vector<1x1x128xf32>
    %27 = vector.shape_cast %26 : vector<1x1x128xf32> to vector<1x128xf32>
    %cst_13 = arith.constant 1.000000e+00 : f32
    %28 = vector.broadcast %cst_13 : f32 to vector<1x128xf32>
    %29 = arith.addf %28, %27 : vector<1x128xf32>
    %30 = vector.broadcast %29 : vector<1x128xf32> to vector<16x128xf32>
    %31 = arith.mulf %25, %30 : vector<16x128xf32>
    %c0_14 = arith.constant 0 : index
    %c0_15 = arith.constant 0 : index
    %c0_16 = arith.constant 0 : index
    %32 = vector.load %arg3[%c0_14, %c0_15, %c0_16] : memref<1x1x128xf32, #tpu.memory_space<vmem>>, vector<1x1x128xf32>
    %33 = vector.shape_cast %32 : vector<1x1x128xf32> to vector<1x128xf32>
    %34 = vector.broadcast %33 : vector<1x128xf32> to vector<16x128xf32>
    %35 = arith.addf %31, %34 : vector<16x128xf32>
    %36 = arith.truncf %35 : vector<16x128xf32> to vector<16x128xbf16>
    %c0_17 = arith.constant 0 : index
    %c0_18 = arith.constant 0 : index
    %37 = vector.load %arg9[%c0_17, %c0_18] : memref<128x384xbf16, #tpu.memory_space<vmem>>, vector<128x384xbf16>
    %cst_19 = arith.constant dense<0.000000e+00> : vector<16x384xf32>
    %38 = tpu.matmul %36, %37, %cst_19 {dimension_numbers = #tpu.dot_dimension_numbers<[1], [0], [0], [1], [0, 0, 1, 1], [], []>} : vector<16x128xbf16>, vector<128x384xbf16>, vector<16x384xf32> -> vector<16x384xf32>
    %c0_20 = arith.constant 0 : index
    %c0_21 = arith.constant 0 : index
    %39 = vector.load %arg10[%c0_20, %c0_21] : memref<1x384xf32, #tpu.memory_space<vmem>>, vector<1x384xf32>
    %40 = vector.broadcast %39 : vector<1x384xf32> to vector<16x384xf32>
    %41 = arith.addf %38, %40 : vector<16x384xf32>
    %42 = vector.extract_strided_slice %41 {offsets = [0, 0], sizes = [16, 128], strides = [1, 1]} : vector<16x384xf32> to vector<16x128xf32>
    %43 = vector.extract_strided_slice %41 {offsets = [0, 128], sizes = [16, 128], strides = [1, 1]} : vector<16x384xf32> to vector<16x128xf32>
    %44 = vector.extract_strided_slice %41 {offsets = [0, 256], sizes = [16, 128], strides = [1, 1]} : vector<16x384xf32> to vector<16x128xf32>
    %c0_22 = arith.constant 0 : index
    %c0_23 = arith.constant 0 : index
    %45 = vector.load %arg11[%c0_22, %c0_23] : memref<1x128xf32, #tpu.memory_space<vmem>>, vector<1x128xf32>
    %46 = arith.mulf %42, %42 : vector<16x128xf32>
    %cst_24 = arith.constant dense<0.000000e+00> : vector<16xf32>
    %47 = vector.multi_reduction <add>, %46, %cst_24 [1] : vector<16x128xf32> to vector<16xf32>
    %48 = vector.shape_cast %47 : vector<16xf32> to vector<16x1xf32>
    %cst_25 = arith.constant 1.280000e+02 : f32
    %49 = vector.broadcast %cst_25 : f32 to vector<16x1xf32>
    %50 = arith.divf %48, %49 : vector<16x1xf32>
    %cst_26 = arith.constant 9.99999997E-7 : f32
    %51 = vector.broadcast %cst_26 : f32 to vector<16x1xf32>
    %52 = arith.addf %50, %51 : vector<16x1xf32>
    %53 = math.rsqrt %52 : vector<16x1xf32>
    %54 = vector.broadcast %53 : vector<16x1xf32> to vector<16x128xf32>
    %55 = arith.mulf %42, %54 : vector<16x128xf32>
    %56 = vector.broadcast %45 : vector<1x128xf32> to vector<16x128xf32>
    %57 = arith.mulf %55, %56 : vector<16x128xf32>
    %c0_27 = arith.constant 0 : index
    %c0_28 = arith.constant 0 : index
    %58 = vector.load %arg12[%c0_27, %c0_28] : memref<1x128xf32, #tpu.memory_space<vmem>>, vector<1x128xf32>
    %59 = arith.mulf %43, %43 : vector<16x128xf32>
    %cst_29 = arith.constant dense<0.000000e+00> : vector<16xf32>
    %60 = vector.multi_reduction <add>, %59, %cst_29 [1] : vector<16x128xf32> to vector<16xf32>
    %61 = vector.shape_cast %60 : vector<16xf32> to vector<16x1xf32>
    %cst_30 = arith.constant 1.280000e+02 : f32
    %62 = vector.broadcast %cst_30 : f32 to vector<16x1xf32>
    %63 = arith.divf %61, %62 : vector<16x1xf32>
    %cst_31 = arith.constant 9.99999997E-7 : f32
    %64 = vector.broadcast %cst_31 : f32 to vector<16x1xf32>
    %65 = arith.addf %63, %64 : vector<16x1xf32>
    %66 = math.rsqrt %65 : vector<16x1xf32>
    %67 = vector.broadcast %66 : vector<16x1xf32> to vector<16x128xf32>
    %68 = arith.mulf %43, %67 : vector<16x128xf32>
    %69 = vector.broadcast %58 : vector<1x128xf32> to vector<16x128xf32>
    %70 = arith.mulf %68, %69 : vector<16x128xf32>
    %c0_32 = arith.constant 0 : index
    %c0_33 = arith.constant 0 : index
    %71 = vector.load %arg5[%c0_32, %c0_33] : memref<16x64xbf16, #tpu.memory_space<vmem>>, vector<16x64xbf16>
    %72 = arith.extf %71 : vector<16x64xbf16> to vector<16x64xf32>
    %c0_34 = arith.constant 0 : index
    %c0_35 = arith.constant 0 : index
    %73 = vector.load %arg6[%c0_34, %c0_35] : memref<16x64xbf16, #tpu.memory_space<vmem>>, vector<16x64xbf16>
    %74 = arith.extf %73 : vector<16x64xbf16> to vector<16x64xf32>
    %75 = tpu.concatenate %72, %72 in 1 : vector<16x64xf32>, vector<16x64xf32> -> vector<16x128xf32>
    %cst_36 = arith.constant 0.000000e+00 : f32
    %76 = vector.broadcast %cst_36 : f32 to vector<16x64xf32>
    %77 = arith.subf %76, %74 : vector<16x64xf32>
    %78 = tpu.concatenate %77, %74 in 1 : vector<16x64xf32>, vector<16x64xf32> -> vector<16x128xf32>
    %79 = arith.mulf %57, %75 : vector<16x128xf32>
    %c64_i32 = arith.constant 64 : i32
    %80 = tpu.dynamic_rotate %57 by %c64_i32 dim 1 : vector<16x128xf32>, i32 -> vector<16x128xf32>
    %81 = arith.mulf %80, %78 : vector<16x128xf32>
    %82 = arith.addf %79, %81 : vector<16x128xf32>
    %83 = arith.mulf %70, %75 : vector<16x128xf32>
    %c64_i32_37 = arith.constant 64 : i32
    %84 = tpu.dynamic_rotate %70 by %c64_i32_37 dim 1 : vector<16x128xf32>, i32 -> vector<16x128xf32>
    %85 = arith.mulf %84, %78 : vector<16x128xf32>
    %86 = arith.addf %83, %85 : vector<16x128xf32>
    %cst_38 = arith.constant 0.176776692 : f32
    %87 = vector.broadcast %cst_38 : f32 to vector<16x128xf32>
    %88 = arith.mulf %82, %87 : vector<16x128xf32>
    %89 = arith.truncf %88 : vector<16x128xf32> to vector<16x128xbf16>
    %c0_39 = arith.constant 0 : index
    %c0_40 = arith.constant 0 : index
    %c0_41 = arith.constant 0 : index
    %90 = vector.load %arg13[%c0_39, %c0_40, %c0_41] : memref<1x16x128xbf16, #tpu.memory_space<vmem>>, vector<1x16x128xbf16>
    %91 = vector.shape_cast %90 : vector<1x16x128xbf16> to vector<16x128xbf16>
    %92 = vector.shape_cast %89 : vector<16x128xbf16> to vector<1x16x128xbf16>
    tpu.vector_store %arg13[%c0_39, %c0_40, %c0_41], %92 {strides = array<i32>} : memref<1x16x128xbf16, #tpu.memory_space<vmem>>, vector<1x16x128xbf16>,
    %93 = arith.truncf %86 : vector<16x128xf32> to vector<16x128xbf16>
    %c0_42 = arith.constant 0 : index
    %c0_43 = arith.constant 0 : index
    %c0_44 = arith.constant 0 : index
    %94 = vector.load %arg14[%c0_42, %c0_43, %c0_44] : memref<1x16x128xbf16, #tpu.memory_space<vmem>>, vector<1x16x128xbf16>
    %95 = vector.shape_cast %94 : vector<1x16x128xbf16> to vector<16x128xbf16>
    %96 = vector.shape_cast %93 : vector<16x128xbf16> to vector<1x16x128xbf16>
    tpu.vector_store %arg14[%c0_42, %c0_43, %c0_44], %96 {strides = array<i32>} : memref<1x16x128xbf16, #tpu.memory_space<vmem>>, vector<1x16x128xbf16>,
    %97 = arith.truncf %44 : vector<16x128xf32> to vector<16x128xbf16>
    %c0_45 = arith.constant 0 : index
    %c0_46 = arith.constant 0 : index
    %c0_47 = arith.constant 0 : index
    %98 = vector.load %arg15[%c0_45, %c0_46, %c0_47] : memref<1x16x128xbf16, #tpu.memory_space<vmem>>, vector<1x16x128xbf16>
    %99 = vector.shape_cast %98 : vector<1x16x128xbf16> to vector<16x128xbf16>
    %100 = vector.shape_cast %97 : vector<16x128xbf16> to vector<1x16x128xbf16>
    tpu.vector_store %arg15[%c0_45, %c0_46, %c0_47], %100 {strides = array<i32>} : memref<1x16x128xbf16, #tpu.memory_space<vmem>>, vector<1x16x128xbf16>,
    return
  }
  func.func @transform_0(%arg0: i32, %arg1: i32) -> (i32, i32, i32) {
    %c0_i32 = arith.constant 0 : i32
    %c0_i32_0 = arith.constant 0 : i32
    return %arg0, %arg1, %c0_i32 : i32, i32, i32
  }
  func.func @transform_1(%arg0: i32, %arg1: i32) -> (i32, i32, i32) {
    %c0_i32 = arith.constant 0 : i32
    %c0_i32_0 = arith.constant 0 : i32
    %c0_i32_1 = arith.constant 0 : i32
    return %arg0, %c0_i32, %c0_i32_0 : i32, i32, i32
  }
  func.func @transform_2(%arg0: i32, %arg1: i32) -> (i32, i32, i32) {
    %c0_i32 = arith.constant 0 : i32
    %c0_i32_0 = arith.constant 0 : i32
    %c0_i32_1 = arith.constant 0 : i32
    return %arg0, %c0_i32, %c0_i32_0 : i32, i32, i32
  }
  func.func @transform_3(%arg0: i32, %arg1: i32) -> (i32, i32) {
    %c0_i32 = arith.constant 0 : i32
    %c0_i32_0 = arith.constant 0 : i32
    return %arg1, %c0_i32 : i32, i32
  }
  func.func @transform_4(%arg0: i32, %arg1: i32) -> (i32, i32) {
    %c0_i32 = arith.constant 0 : i32
    %c0_i32_0 = arith.constant 0 : i32
    return %arg1, %c0_i32 : i32, i32
  }
  func.func @transform_5(%arg0: i32, %arg1: i32) -> (i32, i32) {
    %c0_i32 = arith.constant 0 : i32
    %c0_i32_0 = arith.constant 0 : i32
    %c0_i32_1 = arith.constant 0 : i32
    return %c0_i32, %c0_i32_0 : i32, i32
  }
  func.func @transform_6(%arg0: i32, %arg1: i32) -> (i32, i32) {
    %c0_i32 = arith.constant 0 : i32
    %c0_i32_0 = arith.constant 0 : i32
    %c0_i32_1 = arith.constant 0 : i32
    return %c0_i32, %c0_i32_0 : i32, i32
  }
  func.func @transform_7(%arg0: i32, %arg1: i32) -> (i32, i32) {
    %c0_i32 = arith.constant 0 : i32
    %c0_i32_0 = arith.constant 0 : i32
    %c0_i32_1 = arith.constant 0 : i32
    return %c0_i32, %c0_i32_0 : i32, i32
  }
  func.func @transform_8(%arg0: i32, %arg1: i32) -> (i32, i32) {
    %c0_i32 = arith.constant 0 : i32
    %c0_i32_0 = arith.constant 0 : i32
    %c0_i32_1 = arith.constant 0 : i32
    return %c0_i32, %c0_i32_0 : i32, i32
  }
  func.func @transform_9(%arg0: i32, %arg1: i32) -> (i32, i32) {
    %c0_i32 = arith.constant 0 : i32
    %c0_i32_0 = arith.constant 0 : i32
    %c0_i32_1 = arith.constant 0 : i32
    return %c0_i32, %c0_i32_0 : i32, i32
  }
  func.func @transform_10(%arg0: i32, %arg1: i32) -> (i32, i32) {
    %c0_i32 = arith.constant 0 : i32
    %c0_i32_0 = arith.constant 0 : i32
    %c0_i32_1 = arith.constant 0 : i32
    return %c0_i32, %c0_i32_0 : i32, i32
  }
  func.func @transform_11(%arg0: i32, %arg1: i32) -> (i32, i32, i32) {
    %c0_i32 = arith.constant 0 : i32
    %c0_i32_0 = arith.constant 0 : i32
    return %arg0, %arg1, %c0_i32 : i32, i32, i32
  }
  func.func @transform_12(%arg0: i32, %arg1: i32) -> (i32, i32, i32) {
    %c0_i32 = arith.constant 0 : i32
    %c0_i32_0 = arith.constant 0 : i32
    return %arg0, %arg1, %c0_i32 : i32, i32, i32
  }
  func.func @transform_13(%arg0: i32, %arg1: i32) -> (i32, i32, i32) {
    %c0_i32 = arith.constant 0 : i32
    %c0_i32_0 = arith.constant 0 : i32
    return %arg0, %arg1, %c0_i32 : i32, i32, i32
  }
}

</mosaic_0001>

<llo_original>
// kernel: tpu_custom_call.1
$region0: #{tpu_custom_call.1}
  #allocation0 [shape = 'u32[]', space=smem, size = 0x4, offset = 0x4, fixed_abs, tag = 'smem constant byte address 0x4 - core index']
  #allocation1 [shape = 'u32[144,128]{1,0:T(1,128)}', space=vmem, size = 0x12000, scoped, tag = 'internal scratch']
  %s0 = inlined_call_operand.hbm [shape: f32[8,128], index: 0, kind: input, shape index: {}]
  %s1 = inlined_call_operand.hbm [shape: f32[16,128], index: 1, kind: output, shape index: {}]
  %s2 = sld [smem:[#allocation0]]
  $region41: #{tpu_custom_call.1} parent=0
    _
  %s4 = ssub.s32 1, %s2
  %s5 = scalar_select 0, %s4, %s2
  $region1: #{tpu_custom_call.1} parent=0
    #allocation2 [shape = 'u8[4096]{0}', space=vmem, size = 0x1000, scoped, tag = 'input window, operand 0, single buffered']
    #allocation3 [shape = 's32[2]{0}', space=sflag, size = 0x8, scoped, tag = 'scoped memory for tpu_custom_call.1']
    #allocation4 [shape = 's32[2]{0}', space=sflag, size = 0x8, scoped, tag = 'scoped memory for tpu_custom_call.1']
    #allocation5 [shape = 'u8[8192]{0}', space=vmem, size = 0x2000, scoped, tag = 'output window, operand 0']
    %6 = vsyncpa [#allocation3], 0
    %7 = vsyncpa [#allocation4], 0
    %s8 = scalar_lea.sflag [#allocation4], 1
    %9 = vsyncpa %s8, 0
    loop: start=0, step=1, limit=4
    $region2: #{tpu_custom_call.1} parent=1 // loop_pre_header
      _
    $region3: #{tpu_custom_call.1} parent=1 // loop_header
      %s11 = sphi 0, %s15
      %p12 = scmp.ge.s32.totalorder %s11, 4
      %s19 = sphi 0, %s19
      %s21 = sphi 0, %s19
      %s22 = sphi 0, %s21
      %s36 = sphi 0, %s22
      %s42 = sphi 0, %s44
      %s45 = sphi 0, %s42
      %s46 = sphi 0, %s45
      %s62 = sphi 0, %s46
    $region4: #{tpu_custom_call.1} parent=1 // loop_header_branch
      %14 = sbr.rel (%p12) target = $region8
    $region5: #{tpu_custom_call.1} parent=1 // loop_body
      %s16 = ssub.s32 %s11, 1
      %s17 = ssub.s32 %s11, 2
      %s18 = sadd.s32 %s11, 1
      %s20 = sadd.s32 %s19, 1
      %p23 = scmp.eq.s32.totalorder %s11, 1
      %p24 = scmp.ne.s32.totalorder %s19, %s21
      %p25 = scmp.eq.s32.totalorder %s11, 0
      %p26 = por %p24, %p25
      %p27 = scmp.ne.s32.totalorder %s19, %s21
      %p28 = scmp.eq.s32.totalorder %s16, 1
      %p29 = por %p27, %p28
      %p30 = scmp.ne.s32.totalorder %s21, %s22
      %p31 = scmp.eq.s32.totalorder %s16, 0
      %p32 = por %p30, %p31
      %p33 = scmp.ne.s32.totalorder %s21, %s22
      %p34 = scmp.eq.s32.totalorder %s17, 1
      %p35 = por %p33, %p34
      %p37 = scmp.ne.s32.totalorder %s22, %s36
      %p38 = scmp.eq.s32.totalorder %s17, 0
      %p39 = por %p37, %p38
      %s40 = ssub.s32 %s11, %s18
      %p41 = scmp.eq.s32.totalorder %s40, 0
      %s43 = sadd.s32 %s42, 1
      %s44 = scalar_select %p41, %s42, %s43
      %p47 = pneg %p41
      %p48 = scmp.eq.s32.totalorder %s11, 1
      %p49 = por %p47, %p48
      %p50 = scmp.ne.s32.totalorder %s42, %s45
      %p51 = scmp.eq.s32.totalorder %s11, 0
      %p52 = por %p50, %p51
      %p53 = scmp.ne.s32.totalorder %s42, %s45
      %p54 = scmp.eq.s32.totalorder %s16, 1
      %p55 = por %p53, %p54
      %p56 = scmp.ne.s32.totalorder %s45, %s46
      %p57 = scmp.eq.s32.totalorder %s16, 0
      %p58 = por %p56, %p57
      %p59 = scmp.ne.s32.totalorder %s45, %s46
      %p60 = scmp.eq.s32.totalorder %s17, 1
      %p61 = por %p59, %p60
      %p63 = scmp.ne.s32.totalorder %s46, %s62
      %p64 = scmp.eq.s32.totalorder %s17, 0
      %p65 = por %p63, %p64
      %p66 = scmp.le.s32.totalorder 1, %s11
      %p67 = scmp.lt.s32.totalorder %s11, 3
      %p68 = pnand %p66, %p67
      %p69 = pneg %p68
      // Predicated region
      $region9: #{tpu_custom_call.1} parent=5 // pred_check
        _
      $region10: #{tpu_custom_call.1} parent=5 // pred_check_branch
        %71 = sbr.rel (%p68) target = $region12
      $region11: #{tpu_custom_call.1} parent=5 // pred_region
        %s72 = ssub.s32 %s11, 1
        // Predicated region
        $region13: #{tpu_custom_call.1} parent=11 // pred_check
          %p73 = pneg %p32
        $region14: #{tpu_custom_call.1} parent=11 // pred_check_branch
          %75 = sbr.rel (%p73) target = $region16
        $region15: #{tpu_custom_call.1} parent=11 // pred_region
          %s77 = ssub.s32 128, 128
          %78 = vsyncadd [#allocation3], %s77
          %s80 = sshll.u32 [#allocation2], 4
          %s81 = int_to_ptr.vmem [resolvable:$true] %s80
          %83 = dma.hbm_to_vmem [thread:$0]  %s0, 128, %s81, [#allocation3]
        $region16: #{tpu_custom_call.1} parent=11 // pred_fallthru
          _
      $region12: #{tpu_custom_call.1} parent=5 // pred_fallthru
        _
      %p84 = scmp.lt.s32.totalorder %s11, 2
      // Predicated region
      $region17: #{tpu_custom_call.1} parent=5 // pred_check
        %p85 = pneg %p84
      $region18: #{tpu_custom_call.1} parent=5 // pred_check_branch
        %87 = sbr.rel (%p85) target = $region20
      $region19: #{tpu_custom_call.1} parent=5 // pred_region
        _
      $region20: #{tpu_custom_call.1} parent=5 // pred_fallthru
        _
      %p88 = scmp.le.s32.totalorder 1, %s11
      %p89 = scmp.lt.s32.totalorder %s11, 3
      %p90 = pnand %p88, %p89
      %p91 = pneg %p90
      // Predicated region
      $region21: #{tpu_custom_call.1} parent=5 // pred_check
        _
      $region22: #{tpu_custom_call.1} parent=5 // pred_check_branch
        %93 = sbr.rel (%p90) target = $region24
      $region23: #{tpu_custom_call.1} parent=5 // pred_region
        %s94 = ssub.s32 %s11, 1
        // Predicated region
        $region25: #{tpu_custom_call.1} parent=23 // pred_check
          %p95 = pneg %p32
        $region26: #{tpu_custom_call.1} parent=23 // pred_check_branch
          %97 = sbr.rel (%p95) target = $region28
        $region27: #{tpu_custom_call.1} parent=23 // pred_region
          %98 = dma.done [#allocation3], 128
        $region28: #{tpu_custom_call.1} parent=23 // pred_fallthru
          _
        %p99 = pneg %p32
        %p100 = pneg %p29
        %p101 = pneg %p58
        %p102 = pneg %p55
        %s103 = sand.u32 %s45, 1
        %s104 = scalar_lea.sflag [#allocation4], %s103
        %s105 = sand.u32 %s45, 1
        %s106 = smul.addr %s105, 8
        %s107 = scalar_lea.vmem [#allocation5], %s106
        %v108 = vld [vmem:[#allocation2] sm:$0xff]
        %v109 = vadd.f32 %v108, 1.0
        %110 = vst [vmem:[%s107] sm:$0xff] %v109
        %s111 = sand.u32 %s45, 1
        %s112 = scalar_lea.sflag [#allocation4], %s111
        %s113 = sand.u32 %s45, 1
        %s114 = smul.addr %s113, 8
        %s115 = scalar_lea.vmem [#allocation5], %s114
        // Predicated region
        $region29: #{tpu_custom_call.1} parent=23 // pred_check
          %p116 = pneg %p55
        $region30: #{tpu_custom_call.1} parent=23 // pred_check_branch
          %118 = sbr.rel (%p116) target = $region32
        $region31: #{tpu_custom_call.1} parent=23 // pred_region
          %s120 = ssub.s32 128, 128
          %121 = vsyncadd %s112, %s120
          %s122 = smul.addr %s16, 128
          %s123 = scalar_lea.hbm %s1, %s122
          %s125 = sshll.u32 %s115, 4
          %s126 = int_to_ptr.vmem [resolvable:$true] %s125
          %128 = dma.vmem_to_hbm [thread:$0]  %s126, 128, %s123, %s112
        $region32: #{tpu_custom_call.1} parent=23 // pred_fallthru
          _
      $region24: #{tpu_custom_call.1} parent=5 // pred_fallthru
        _
      %p129 = scmp.le.s32.totalorder 2, %s11
      // Predicated region
      $region33: #{tpu_custom_call.1} parent=5 // pred_check
        %p130 = pneg %p129
      $region34: #{tpu_custom_call.1} parent=5 // pred_check_branch
        %132 = sbr.rel (%p130) target = $region36
      $region35: #{tpu_custom_call.1} parent=5 // pred_region
        %s133 = ssub.s32 %s11, 2
        // Predicated region
        $region37: #{tpu_custom_call.1} parent=35 // pred_check
          %p134 = pneg %p61
        $region38: #{tpu_custom_call.1} parent=35 // pred_check_branch
          %136 = sbr.rel (%p134) target = $region40
        $region39: #{tpu_custom_call.1} parent=35 // pred_region
          %s137 = sand.u32 %s46, 1
          %s138 = scalar_lea.sflag [#allocation4], %s137
          %s139 = sand.u32 %s46, 1
          %s140 = smul.addr %s139, 8
          %s141 = scalar_lea.vmem [#allocation5], %s140
          %142 = dma.done %s138, 128
        $region40: #{tpu_custom_call.1} parent=35 // pred_fallthru
          _
      $region36: #{tpu_custom_call.1} parent=5 // pred_fallthru
        _
    $region6: #{tpu_custom_call.1} parent=1 // loop_footer
      %s15 = sadd.s32 1, %s11
    $region7: #{tpu_custom_call.1} parent=1 // loop_footer_branch
      %10 = sbr.rel target = $region3
    $region8: #{tpu_custom_call.1} parent=1 // loop_exit
      _
    %143 = vsyncpa [#allocation3], 1
    %s144 = scalar_lea.sflag [#allocation3], 1
    %145 = vsyncpa %s144, 1
    %146 = vsyncpa [#allocation4], 1
    %s147 = scalar_lea.sflag [#allocation4], 1
    %148 = vsyncpa %s147, 1

// kernel: tpu_custom_call.1
$region0: #{tpu_custom_call.1}
  #allocation0 [shape = 'u32[]', space=smem, size = 0x4, offset = 0x4, fixed_abs, tag = 'smem constant byte address 0x4 - core index']
  #allocation1 [shape = 'u32[144,128]{1,0:T(1,128)}', space=vmem, size = 0x12000, scoped, tag = 'internal scratch']
  %s0 = inlined_call_operand.hbm [shape: f32[2,32,128], index: 0, kind: input, shape index: {}]
  %s1 = inlined_call_operand.hbm [shape: f32[2,1,128], index: 1, kind: input, shape index: {}]
  %s2 = inlined_call_operand.hbm [shape: f32[2,1,128], index: 2, kind: input, shape index: {}]
  %s3 = inlined_call_operand.hbm [shape: bf16[32,64], index: 3, kind: input, shape index: {}]
  %s4 = inlined_call_operand.hbm [shape: bf16[32,64], index: 4, kind: input, shape index: {}]
  %s5 = inlined_call_operand.hbm [shape: f32[1,128], index: 5, kind: input, shape index: {}]
  %s6 = inlined_call_operand.hbm [shape: f32[1,128], index: 6, kind: input, shape index: {}]
  %s7 = inlined_call_operand.hbm [shape: bf16[128,384], index: 7, kind: input, shape index: {}]
  %s8 = inlined_call_operand.hbm [shape: f32[1,384], index: 8, kind: input, shape index: {}]
  %s9 = inlined_call_operand.hbm [shape: f32[1,128], index: 9, kind: input, shape index: {}]
  %s10 = inlined_call_operand.hbm [shape: f32[1,128], index: 10, kind: input, shape index: {}]
  %s11 = inlined_call_operand.hbm [shape: bf16[2,32,128], index: 11, kind: output, shape index: {0}]
  %s12 = inlined_call_operand.hbm [shape: bf16[2,32,128], index: 12, kind: output, shape index: {1}]
  %s13 = inlined_call_operand.hbm [shape: bf16[2,32,128], index: 13, kind: output, shape index: {2}]
  %14 = xla_tuple %s11, %s12, %s13
  %s15 = sld [smem:[#allocation0]]
  $region137: #{tpu_custom_call.1} parent=0
    _
  %s17 = ssub.s32 1, %s15
  %s18 = scalar_select 0, %s17, %s15
  $region1: #{tpu_custom_call.1} parent=0
    #allocation2 [shape = 'u8[16384]{0}', space=vmem, size = 0x4000, scoped, tag = 'input window, operand 0']
    #allocation3 [shape = 's32[2]{0}', space=sflag, size = 0x8, scoped, tag = 'scoped memory for tpu_custom_call.1']
    #allocation4 [shape = 's32[2]{0}', space=sflag, size = 0x8, scoped, tag = 'scoped memory for tpu_custom_call.1']
    #allocation5 [shape = 'u8[1024]{0}', space=vmem, size = 0x400, scoped, tag = 'input window, operand 1']
    #allocation6 [shape = 's32[2]{0}', space=sflag, size = 0x8, scoped, tag = 'scoped memory for tpu_custom_call.1']
    #allocation7 [shape = 'u8[1024]{0}', space=vmem, size = 0x400, scoped, tag = 'input window, operand 2']
    #allocation8 [shape = 'u8[8192]{0}', space=vmem, size = 0x2000, scoped, tag = 'input window, operand 3']
    #allocation9 [shape = 's32[2]{0}', space=sflag, size = 0x8, scoped, tag = 'scoped memory for tpu_custom_call.1']
    #allocation10 [shape = 'u8[8192]{0}', space=vmem, size = 0x2000, scoped, tag = 'input window, operand 4']
    #allocation11 [shape = 'u8[512]{0}', space=vmem, size = 0x400, scoped, tag = 'input window, operand 5, single buffered']
    #allocation12 [shape = 's32[1]{0}', space=sflag, size = 0x4, scoped, tag = 'scoped memory for tpu_custom_call.1']
    #allocation13 [shape = 'u8[512]{0}', space=vmem, size = 0x400, scoped, tag = 'input window, operand 6, single buffered']
    #allocation14 [shape = 'u8[98304]{0}', space=vmem, size = 0x18000, scoped, tag = 'input window, operand 7, single buffered']
    #allocation15 [shape = 's32[1]{0}', space=sflag, size = 0x4, scoped, tag = 'scoped memory for tpu_custom_call.1']
    #allocation16 [shape = 'u8[1536]{0}', space=vmem, size = 0x800, scoped, tag = 'input window, operand 8, single buffered']
    #allocation17 [shape = 'u8[512]{0}', space=vmem, size = 0x400, scoped, tag = 'input window, operand 9, single buffered']
    #allocation18 [shape = 's32[1]{0}', space=sflag, size = 0x4, scoped, tag = 'scoped memory for tpu_custom_call.1']
    #allocation19 [shape = 'u8[512]{0}', space=vmem, size = 0x400, scoped, tag = 'input window, operand 10, single buffered']
    #allocation20 [shape = 'u8[8192]{0}', space=vmem, size = 0x2000, scoped, tag = 'output window, operand 0']
    #allocation21 [shape = 'u8[8192]{0}', space=vmem, size = 0x2000, scoped, tag = 'output window, operand 1']
    #allocation22 [shape = 's32[2]{0}', space=sflag, size = 0x8, scoped, tag = 'scoped memory for tpu_custom_call.1']
    #allocation23 [shape = 'u8[8192]{0}', space=vmem, size = 0x2000, scoped, tag = 'output window, operand 2']
    %19 = vsyncpa [#allocation3], 0
    %s20 = scalar_lea.sflag [#allocation3], 1
    %21 = vsyncpa %s20, 0
    %22 = vsyncpa [#allocation6], 0
    %s23 = scalar_lea.sflag [#allocation6], 1
    %24 = vsyncpa %s23, 0
    %25 = vsyncpa [#allocation9], 0
    %s26 = scalar_lea.sflag [#allocation9], 1
    %27 = vsyncpa %s26, 0
    %28 = vsyncpa [#allocation12], 0
    %29 = vsyncpa [#allocation15], 0
    %30 = vsyncpa [#allocation18], 0
    %31 = vsyncpa [#allocation4], 0
    %s32 = scalar_lea.sflag [#allocation4], 1
    %33 = vsyncpa %s32, 0
    %34 = vsyncpa [#allocation22], 0
    %s35 = scalar_lea.sflag [#allocation22], 1
    %36 = vsyncpa %s35, 0
    loop: start=0, step=1, limit=6
    $region2: #{tpu_custom_call.1} parent=1 // loop_pre_header
      _
    $region3: #{tpu_custom_call.1} parent=1 // loop_header
      %s38 = sphi 0, %s42
      %p39 = scmp.ge.s32.totalorder %s38, 6
      %s45 = sphi 0, %s57
      %s46 = sphi 0, %s53
      %s47 = sphi 0, %s45
      %s48 = sphi 0, %s46
      %s49 = sphi 0, %s47
      %s50 = sphi 0, %s48
      %s62 = sphi 0, %s64
      %s65 = sphi 0, %s62
      %s66 = sphi 0, %s65
      %s82 = sphi 0, %s66
      %s88 = sphi 0, %s90
      %s91 = sphi 0, %s88
      %s92 = sphi 0, %s91
      %s108 = sphi 0, %s92
      %s114 = sphi 0, %s116
      %s117 = sphi 0, %s114
      %s118 = sphi 0, %s117
      %s134 = sphi 0, %s118
      %s140 = sphi 0, %s142
      %s143 = sphi 0, %s140
      %s144 = sphi 0, %s143
      %s160 = sphi 0, %s144
      %s166 = sphi 0, %s168
      %s169 = sphi 0, %s166
      %s170 = sphi 0, %s169
      %s186 = sphi 0, %s170
      %s190 = sphi 0, %s190
      %s192 = sphi 0, %s190
      %s193 = sphi 0, %s192
      %s207 = sphi 0, %s193
      %s211 = sphi 0, %s211
      %s213 = sphi 0, %s211
      %s214 = sphi 0, %s213
      %s228 = sphi 0, %s214
      %s232 = sphi 0, %s232
      %s234 = sphi 0, %s232
      %s235 = sphi 0, %s234
      %s249 = sphi 0, %s235
      %s253 = sphi 0, %s253
      %s255 = sphi 0, %s253
      %s256 = sphi 0, %s255
      %s270 = sphi 0, %s256
      %s274 = sphi 0, %s274
      %s276 = sphi 0, %s274
      %s277 = sphi 0, %s276
      %s291 = sphi 0, %s277
      %s295 = sphi 0, %s295
      %s297 = sphi 0, %s295
      %s298 = sphi 0, %s297
      %s312 = sphi 0, %s298
      %s320 = sphi 0, %s322
      %s323 = sphi 0, %s320
      %s324 = sphi 0, %s323
      %s340 = sphi 0, %s324
      %s348 = sphi 0, %s350
      %s351 = sphi 0, %s348
      %s352 = sphi 0, %s351
      %s368 = sphi 0, %s352
      %s376 = sphi 0, %s378
      %s379 = sphi 0, %s376
      %s380 = sphi 0, %s379
      %s396 = sphi 0, %s380
    $region4: #{tpu_custom_call.1} parent=1 // loop_header_branch
      %41 = sbr.rel (%p39) target = $region8
    $region5: #{tpu_custom_call.1} parent=1 // loop_body
      %s43 = ssub.s32 %s38, 1
      %s44 = ssub.s32 %s38, 2
      %s51 = sadd.s32 1, %s46
      %p52 = scmp.ge.s32.totalorder %s51, 2
      %s53 = scalar_select %p52, 0, %s51
      %s54 = sadd.s32 1, %s45
      %s55 = scalar_select %p52, %s54, %s45
      %p56 = scmp.ge.s32.totalorder %s55, 2
      %s57 = scalar_select %p56, 0, %s55
      %s58 = ssub.s32 %s45, %s57
      %s59 = ssub.s32 %s46, %s53
      %s60 = sor.u32 %s58, %s59
      %p61 = scmp.eq.s32.totalorder %s60, 0
      %s63 = sadd.s32 %s62, 1
      %s64 = scalar_select %p61, %s62, %s63
      %p67 = pneg %p61
      %p68 = scmp.eq.s32.totalorder %s38, 3
      %p69 = por %p67, %p68
      %p70 = scmp.ne.s32.totalorder %s62, %s65
      %p71 = scmp.eq.s32.totalorder %s38, 0
      %p72 = por %p70, %p71
      %p73 = scmp.ne.s32.totalorder %s62, %s65
      %p74 = scmp.eq.s32.totalorder %s43, 3
      %p75 = por %p73, %p74
      %p76 = scmp.ne.s32.totalorder %s65, %s66
      %p77 = scmp.eq.s32.totalorder %s43, 0
      %p78 = por %p76, %p77
      %p79 = scmp.ne.s32.totalorder %s65, %s66
      %p80 = scmp.eq.s32.totalorder %s44, 3
      %p81 = por %p79, %p80
      %p83 = scmp.ne.s32.totalorder %s66, %s82
      %p84 = scmp.eq.s32.totalorder %s44, 0
      %p85 = por %p83, %p84
      %s86 = ssub.s32 %s45, %s57
      %p87 = scmp.eq.s32.totalorder %s86, 0
      %s89 = sadd.s32 %s88, 1
      %s90 = scalar_select %p87, %s88, %s89
      %p93 = pneg %p87
      %p94 = scmp.eq.s32.totalorder %s38, 3
      %p95 = por %p93, %p94
      %p96 = scmp.ne.s32.totalorder %s88, %s91
      %p97 = scmp.eq.s32.totalorder %s38, 0
      %p98 = por %p96, %p97
      %p99 = scmp.ne.s32.totalorder %s88, %s91
      %p100 = scmp.eq.s32.totalorder %s43, 3
      %p101 = por %p99, %p100
      %p102 = scmp.ne.s32.totalorder %s91, %s92
      %p103 = scmp.eq.s32.totalorder %s43, 0
      %p104 = por %p102, %p103
      %p105 = scmp.ne.s32.totalorder %s91, %s92
      %p106 = scmp.eq.s32.totalorder %s44, 3
      %p107 = por %p105, %p106
      %p109 = scmp.ne.s32.totalorder %s92, %s108
      %p110 = scmp.eq.s32.totalorder %s44, 0
      %p111 = por %p109, %p110
      %s112 = ssub.s32 %s45, %s57
      %p113 = scmp.eq.s32.totalorder %s112, 0
      %s115 = sadd.s32 %s114, 1
      %s116 = scalar_select %p113, %s114, %s115
      %p119 = pneg %p113
      %p120 = scmp.eq.s32.totalorder %s38, 3
      %p121 = por %p119, %p120
      %p122 = scmp.ne.s32.totalorder %s114, %s117
      %p123 = scmp.eq.s32.totalorder %s38, 0
      %p124 = por %p122, %p123
      %p125 = scmp.ne.s32.totalorder %s114, %s117
      %p126 = scmp.eq.s32.totalorder %s43, 3
      %p127 = por %p125, %p126
      %p128 = scmp.ne.s32.totalorder %s117, %s118
      %p129 = scmp.eq.s32.totalorder %s43, 0
      %p130 = por %p128, %p129
      %p131 = scmp.ne.s32.totalorder %s117, %s118
      %p132 = scmp.eq.s32.totalorder %s44, 3
      %p133 = por %p131, %p132
      %p135 = scmp.ne.s32.totalorder %s118, %s134
      %p136 = scmp.eq.s32.totalorder %s44, 0
      %p137 = por %p135, %p136
      %s138 = ssub.s32 %s46, %s53
      %p139 = scmp.eq.s32.totalorder %s138, 0
      %s141 = sadd.s32 %s140, 1
      %s142 = scalar_select %p139, %s140, %s141
      %p145 = pneg %p139
      %p146 = scmp.eq.s32.totalorder %s38, 3
      %p147 = por %p145, %p146
      %p148 = scmp.ne.s32.totalorder %s140, %s143
      %p149 = scmp.eq.s32.totalorder %s38, 0
      %p150 = por %p148, %p149
      %p151 = scmp.ne.s32.totalorder %s140, %s143
      %p152 = scmp.eq.s32.totalorder %s43, 3
      %p153 = por %p151, %p152
      %p154 = scmp.ne.s32.totalorder %s143, %s144
      %p155 = scmp.eq.s32.totalorder %s43, 0
      %p156 = por %p154, %p155
      %p157 = scmp.ne.s32.totalorder %s143, %s144
      %p158 = scmp.eq.s32.totalorder %s44, 3
      %p159 = por %p157, %p158
      %p161 = scmp.ne.s32.totalorder %s144, %s160
      %p162 = scmp.eq.s32.totalorder %s44, 0
      %p163 = por %p161, %p162
      %s164 = ssub.s32 %s46, %s53
      %p165 = scmp.eq.s32.totalorder %s164, 0
      %s167 = sadd.s32 %s166, 1
      %s168 = scalar_select %p165, %s166, %s167
      %p171 = pneg %p165
      %p172 = scmp.eq.s32.totalorder %s38, 3
      %p173 = por %p171, %p172
      %p174 = scmp.ne.s32.totalorder %s166, %s169
      %p175 = scmp.eq.s32.totalorder %s38, 0
      %p176 = por %p174, %p175
      %p177 = scmp.ne.s32.totalorder %s166, %s169
      %p178 = scmp.eq.s32.totalorder %s43, 3
      %p179 = por %p177, %p178
      %p180 = scmp.ne.s32.totalorder %s169, %s170
      %p181 = scmp.eq.s32.totalorder %s43, 0
      %p182 = por %p180, %p181
      %p183 = scmp.ne.s32.totalorder %s169, %s170
      %p184 = scmp.eq.s32.totalorder %s44, 3
      %p185 = por %p183, %p184
      %p187 = scmp.ne.s32.totalorder %s170, %s186
      %p188 = scmp.eq.s32.totalorder %s44, 0
      %p189 = por %p187, %p188
      %s191 = sadd.s32 %s190, 1
      %p194 = scmp.eq.s32.totalorder %s38, 3
      %p195 = scmp.ne.s32.totalorder %s190, %s192
      %p196 = scmp.eq.s32.totalorder %s38, 0
      %p197 = por %p195, %p196
      %p198 = scmp.ne.s32.totalorder %s190, %s192
      %p199 = scmp.eq.s32.totalorder %s43, 3
      %p200 = por %p198, %p199
      %p201 = scmp.ne.s32.totalorder %s192, %s193
      %p202 = scmp.eq.s32.totalorder %s43, 0
      %p203 = por %p201, %p202
      %p204 = scmp.ne.s32.totalorder %s192, %s193
      %p205 = scmp.eq.s32.totalorder %s44, 3
      %p206 = por %p204, %p205
      %p208 = scmp.ne.s32.totalorder %s193, %s207
      %p209 = scmp.eq.s32.totalorder %s44, 0
      %p210 = por %p208, %p209
      %s212 = sadd.s32 %s211, 1
      %p215 = scmp.eq.s32.totalorder %s38, 3
      %p216 = scmp.ne.s32.totalorder %s211, %s213
      %p217 = scmp.eq.s32.totalorder %s38, 0
      %p218 = por %p216, %p217
      %p219 = scmp.ne.s32.totalorder %s211, %s213
      %p220 = scmp.eq.s32.totalorder %s43, 3
      %p221 = por %p219, %p220
      %p222 = scmp.ne.s32.totalorder %s213, %s214
      %p223 = scmp.eq.s32.totalorder %s43, 0
      %p224 = por %p222, %p223
      %p225 = scmp.ne.s32.totalorder %s213, %s214
      %p226 = scmp.eq.s32.totalorder %s44, 3
      %p227 = por %p225, %p226
      %p229 = scmp.ne.s32.totalorder %s214, %s228
      %p230 = scmp.eq.s32.totalorder %s44, 0
      %p231 = por %p229, %p230
      %s233 = sadd.s32 %s232, 1
      %p236 = scmp.eq.s32.totalorder %s38, 3
      %p237 = scmp.ne.s32.totalorder %s232, %s234
      %p238 = scmp.eq.s32.totalorder %s38, 0
      %p239 = por %p237, %p238
      %p240 = scmp.ne.s32.totalorder %s232, %s234
      %p241 = scmp.eq.s32.totalorder %s43, 3
      %p242 = por %p240, %p241
      %p243 = scmp.ne.s32.totalorder %s234, %s235
      %p244 = scmp.eq.s32.totalorder %s43, 0
      %p245 = por %p243, %p244
      %p246 = scmp.ne.s32.totalorder %s234, %s235
      %p247 = scmp.eq.s32.totalorder %s44, 3
      %p248 = por %p246, %p247
      %p250 = scmp.ne.s32.totalorder %s235, %s249
      %p251 = scmp.eq.s32.totalorder %s44, 0
      %p252 = por %p250, %p251
      %s254 = sadd.s32 %s253, 1
      %p257 = scmp.eq.s32.totalorder %s38, 3
      %p258 = scmp.ne.s32.totalorder %s253, %s255
      %p259 = scmp.eq.s32.totalorder %s38, 0
      %p260 = por %p258, %p259
      %p261 = scmp.ne.s32.totalorder %s253, %s255
      %p262 = scmp.eq.s32.totalorder %s43, 3
      %p263 = por %p261, %p262
      %p264 = scmp.ne.s32.totalorder %s255, %s256
      %p265 = scmp.eq.s32.totalorder %s43, 0
      %p266 = por %p264, %p265
      %p267 = scmp.ne.s32.totalorder %s255, %s256
      %p268 = scmp.eq.s32.totalorder %s44, 3
      %p269 = por %p267, %p268
      %p271 = scmp.ne.s32.totalorder %s256, %s270
      %p272 = scmp.eq.s32.totalorder %s44, 0
      %p273 = por %p271, %p272
      %s275 = sadd.s32 %s274, 1
      %p278 = scmp.eq.s32.totalorder %s38, 3
      %p279 = scmp.ne.s32.totalorder %s274, %s276
      %p280 = scmp.eq.s32.totalorder %s38, 0
      %p281 = por %p279, %p280
      %p282 = scmp.ne.s32.totalorder %s274, %s276
      %p283 = scmp.eq.s32.totalorder %s43, 3
      %p284 = por %p282, %p283
      %p285 = scmp.ne.s32.totalorder %s276, %s277
      %p286 = scmp.eq.s32.totalorder %s43, 0
      %p287 = por %p285, %p286
      %p288 = scmp.ne.s32.totalorder %s276, %s277
      %p289 = scmp.eq.s32.totalorder %s44, 3
      %p290 = por %p288, %p289
      %p292 = scmp.ne.s32.totalorder %s277, %s291
      %p293 = scmp.eq.s32.totalorder %s44, 0
      %p294 = por %p292, %p293
      %s296 = sadd.s32 %s295, 1
      %p299 = scmp.eq.s32.totalorder %s38, 3
      %p300 = scmp.ne.s32.totalorder %s295, %s297
      %p301 = scmp.eq.s32.totalorder %s38, 0
      %p302 = por %p300, %p301
      %p303 = scmp.ne.s32.totalorder %s295, %s297
      %p304 = scmp.eq.s32.totalorder %s43, 3
      %p305 = por %p303, %p304
      %p306 = scmp.ne.s32.totalorder %s297, %s298
      %p307 = scmp.eq.s32.totalorder %s43, 0
      %p308 = por %p306, %p307
      %p309 = scmp.ne.s32.totalorder %s297, %s298
      %p310 = scmp.eq.s32.totalorder %s44, 3
      %p311 = por %p309, %p310
      %p313 = scmp.ne.s32.totalorder %s298, %s312
      %p314 = scmp.eq.s32.totalorder %s44, 0
      %p315 = por %p313, %p314
      %s316 = ssub.s32 %s45, %s57
      %s317 = ssub.s32 %s46, %s53
      %s318 = sor.u32 %s316, %s317
      %p319 = scmp.eq.s32.totalorder %s318, 0
      %s321 = sadd.s32 %s320, 1
      %s322 = scalar_select %p319, %s320, %s321
      %p325 = pneg %p319
      %p326 = scmp.eq.s32.totalorder %s38, 3
      %p327 = por %p325, %p326
      %p328 = scmp.ne.s32.totalorder %s320, %s323
      %p329 = scmp.eq.s32.totalorder %s38, 0
      %p330 = por %p328, %p329
      %p331 = scmp.ne.s32.totalorder %s320, %s323
      %p332 = scmp.eq.s32.totalorder %s43, 3
      %p333 = por %p331, %p332
      %p334 = scmp.ne.s32.totalorder %s323, %s324
      %p335 = scmp.eq.s32.totalorder %s43, 0
      %p336 = por %p334, %p335
      %p337 = scmp.ne.s32.totalorder %s323, %s324
      %p338 = scmp.eq.s32.totalorder %s44, 3
      %p339 = por %p337, %p338
      %p341 = scmp.ne.s32.totalorder %s324, %s340
      %p342 = scmp.eq.s32.totalorder %s44, 0
      %p343 = por %p341, %p342
      %s344 = ssub.s32 %s45, %s57
      %s345 = ssub.s32 %s46, %s53
      %s346 = sor.u32 %s344, %s345
      %p347 = scmp.eq.s32.totalorder %s346, 0
      %s349 = sadd.s32 %s348, 1
      %s350 = scalar_select %p347, %s348, %s349
      %p353 = pneg %p347
      %p354 = scmp.eq.s32.totalorder %s38, 3
      %p355 = por %p353, %p354
      %p356 = scmp.ne.s32.totalorder %s348, %s351
      %p357 = scmp.eq.s32.totalorder %s38, 0
      %p358 = por %p356, %p357
      %p359 = scmp.ne.s32.totalorder %s348, %s351
      %p360 = scmp.eq.s32.totalorder %s43, 3
      %p361 = por %p359, %p360
      %p362 = scmp.ne.s32.totalorder %s351, %s352
      %p363 = scmp.eq.s32.totalorder %s43, 0
      %p364 = por %p362, %p363
      %p365 = scmp.ne.s32.totalorder %s351, %s352
      %p366 = scmp.eq.s32.totalorder %s44, 3
      %p367 = por %p365, %p366
      %p369 = scmp.ne.s32.totalorder %s352, %s368
      %p370 = scmp.eq.s32.totalorder %s44, 0
      %p371 = por %p369, %p370
      %s372 = ssub.s32 %s45, %s57
      %s373 = ssub.s32 %s46, %s53
      %s374 = sor.u32 %s372, %s373
      %p375 = scmp.eq.s32.totalorder %s374, 0
      %s377 = sadd.s32 %s376, 1
      %s378 = scalar_select %p375, %s376, %s377
      %p381 = pneg %p375
      %p382 = scmp.eq.s32.totalorder %s38, 3
      %p383 = por %p381, %p382
      %p384 = scmp.ne.s32.totalorder %s376, %s379
      %p385 = scmp.eq.s32.totalorder %s38, 0
      %p386 = por %p384, %p385
      %p387 = scmp.ne.s32.totalorder %s376, %s379
      %p388 = scmp.eq.s32.totalorder %s43, 3
      %p389 = por %p387, %p388
      %p390 = scmp.ne.s32.totalorder %s379, %s380
      %p391 = scmp.eq.s32.totalorder %s43, 0
      %p392 = por %p390, %p391
      %p393 = scmp.ne.s32.totalorder %s379, %s380
      %p394 = scmp.eq.s32.totalorder %s44, 3
      %p395 = por %p393, %p394
      %p397 = scmp.ne.s32.totalorder %s380, %s396
      %p398 = scmp.eq.s32.totalorder %s44, 0
      %p399 = por %p397, %p398
      %p400 = scmp.le.s32.totalorder 1, %s38
      %p401 = scmp.lt.s32.totalorder %s38, 5
      %p402 = pnand %p400, %p401
      %p403 = pneg %p402
      // Predicated region
      $region9: #{tpu_custom_call.1} parent=5 // pred_check
        _
      $region10: #{tpu_custom_call.1} parent=5 // pred_check_branch
        %405 = sbr.rel (%p402) target = $region12
      $region11: #{tpu_custom_call.1} parent=5 // pred_region
        %s406 = ssub.s32 %s38, 1
        // Predicated region
        $region13: #{tpu_custom_call.1} parent=11 // pred_check
          %p407 = pneg %p203
        $region14: #{tpu_custom_call.1} parent=11 // pred_check_branch
          %409 = sbr.rel (%p407) target = $region16
        $region15: #{tpu_custom_call.1} parent=11 // pred_region
          %s411 = ssub.s32 16, 16
          %412 = vsyncadd [#allocation12], %s411
          %s414 = sshll.u32 [#allocation11], 4
          %s415 = int_to_ptr.vmem [resolvable:$true] %s414
          %417 = dma.hbm_to_vmem [thread:$0]  %s5, 16, %s415, [#allocation12]
        $region16: #{tpu_custom_call.1} parent=11 // pred_fallthru
          _
        // Predicated region
        $region17: #{tpu_custom_call.1} parent=11 // pred_check
          %p418 = pneg %p224
        $region18: #{tpu_custom_call.1} parent=11 // pred_check_branch
          %420 = sbr.rel (%p418) target = $region20
        $region19: #{tpu_custom_call.1} parent=11 // pred_region
          %s422 = ssub.s32 16, 16
          %423 = vsyncadd [#allocation12], %s422
          %s425 = sshll.u32 [#allocation13], 4
          %s426 = int_to_ptr.vmem [resolvable:$true] %s425
          %428 = dma.hbm_to_vmem [thread:$0]  %s6, 16, %s426, [#allocation12]
        $region20: #{tpu_custom_call.1} parent=11 // pred_fallthru
          _
        // Predicated region
        $region21: #{tpu_custom_call.1} parent=11 // pred_check
          %p429 = pneg %p245
        $region22: #{tpu_custom_call.1} parent=11 // pred_check_branch
          %431 = sbr.rel (%p429) target = $region24
        $region23: #{tpu_custom_call.1} parent=11 // pred_region
          %s433 = ssub.s32 3072, 3072
          %434 = vsyncadd [#allocation15], %s433
          %s435 = sshll.u32 [#allocation14], 4
          %s436 = int_to_ptr.vmem [resolvable:$true] %s435
          %441 = dma.hbm_to_vmem [thread:$0]  %s7, 3072, %s436, [#allocation15], 192, 192, 12
        $region24: #{tpu_custom_call.1} parent=11 // pred_fallthru
          _
        // Predicated region
        $region25: #{tpu_custom_call.1} parent=11 // pred_check
          %p442 = pneg %p266
        $region26: #{tpu_custom_call.1} parent=11 // pred_check_branch
          %444 = sbr.rel (%p442) target = $region28
        $region27: #{tpu_custom_call.1} parent=11 // pred_region
          %s446 = ssub.s32 48, 48
          %447 = vsyncadd [#allocation15], %s446
          %s449 = sshll.u32 [#allocation16], 4
          %s450 = int_to_ptr.vmem [resolvable:$true] %s449
          %452 = dma.hbm_to_vmem [thread:$0]  %s8, 48, %s450, [#allocation15]
        $region28: #{tpu_custom_call.1} parent=11 // pred_fallthru
          _
        // Predicated region
        $region29: #{tpu_custom_call.1} parent=11 // pred_check
          %p453 = pneg %p287
        $region30: #{tpu_custom_call.1} parent=11 // pred_check_branch
          %455 = sbr.rel (%p453) target = $region32
        $region31: #{tpu_custom_call.1} parent=11 // pred_region
          %s457 = ssub.s32 16, 16
          %458 = vsyncadd [#allocation18], %s457
          %s460 = sshll.u32 [#allocation17], 4
          %s461 = int_to_ptr.vmem [resolvable:$true] %s460
          %463 = dma.hbm_to_vmem [thread:$0]  %s9, 16, %s461, [#allocation18]
        $region32: #{tpu_custom_call.1} parent=11 // pred_fallthru
          _
        // Predicated region
        $region33: #{tpu_custom_call.1} parent=11 // pred_check
          %p464 = pneg %p308
        $region34: #{tpu_custom_call.1} parent=11 // pred_check_branch
          %466 = sbr.rel (%p464) target = $region36
        $region35: #{tpu_custom_call.1} parent=11 // pred_region
          %s468 = ssub.s32 16, 16
          %469 = vsyncadd [#allocation18], %s468
          %s471 = sshll.u32 [#allocation19], 4
          %s472 = int_to_ptr.vmem [resolvable:$true] %s471
          %474 = dma.hbm_to_vmem [thread:$0]  %s10, 16, %s472, [#allocation18]
        $region36: #{tpu_custom_call.1} parent=11 // pred_fallthru
          _
      $region12: #{tpu_custom_call.1} parent=5 // pred_fallthru
        _
      %p475 = scmp.lt.s32.totalorder %s38, 4
      // Predicated region
      $region37: #{tpu_custom_call.1} parent=5 // pred_check
        %p476 = pneg %p475
      $region38: #{tpu_custom_call.1} parent=5 // pred_check_branch
        %478 = sbr.rel (%p476) target = $region40
      $region39: #{tpu_custom_call.1} parent=5 // pred_region
        // Predicated region
        $region41: #{tpu_custom_call.1} parent=39 // pred_check
          %p479 = pneg %p72
        $region42: #{tpu_custom_call.1} parent=39 // pred_check_branch
          %481 = sbr.rel (%p479) target = $region44
        $region43: #{tpu_custom_call.1} parent=39 // pred_region
          %s482 = sand.u32 %s62, 1
          %s483 = scalar_lea.sflag [#allocation3], %s482
          %s484 = sand.u32 %s62, 1
          %s485 = smul.addr %s484, 16
          %s486 = scalar_lea.vmem [#allocation2], %s485
          %s487 = smul.u32 2, %s46
          %s489 = ssub.s32 256, 256
          %490 = vsyncadd %s483, %s489
          %s491 = smul.addr %s45, 4
          %s492 = sadd.s32 %s487, %s491
          %s493 = smul.addr %s492, 128
          %s494 = scalar_lea.hbm %s0, %s493
          %s495 = sshll.u32 %s486, 4
          %s496 = int_to_ptr.vmem [resolvable:$true] %s495
          %501 = dma.hbm_to_vmem [thread:$0]  %s494, 256, %s496, %s483, 128, 128, 8
        $region44: #{tpu_custom_call.1} parent=39 // pred_fallthru
          _
        // Predicated region
        $region45: #{tpu_custom_call.1} parent=39 // pred_check
          %p502 = pneg %p98
        $region46: #{tpu_custom_call.1} parent=39 // pred_check_branch
          %504 = sbr.rel (%p502) target = $region48
        $region47: #{tpu_custom_call.1} parent=39 // pred_region
          %s505 = sand.u32 %s38, 1
          %s506 = scalar_lea.sflag [#allocation6], %s505
          %s507 = sand.u32 %s88, 1
          %s508 = scalar_lea.vmem [#allocation5], %s507
          %s510 = ssub.s32 16, 16
          %511 = vsyncadd %s506, %s510
          %s512 = smul.addr %s45, 16
          %s513 = scalar_lea.hbm %s1, %s512
          %s515 = sshll.u32 %s508, 4
          %s516 = int_to_ptr.vmem [resolvable:$true] %s515
          %518 = dma.hbm_to_vmem [thread:$0]  %s513, 16, %s516, %s506
        $region48: #{tpu_custom_call.1} parent=39 // pred_fallthru
          _
        // Predicated region
        $region49: #{tpu_custom_call.1} parent=39 // pred_check
          %p519 = pneg %p124
        $region50: #{tpu_custom_call.1} parent=39 // pred_check_branch
          %521 = sbr.rel (%p519) target = $region52
        $region51: #{tpu_custom_call.1} parent=39 // pred_region
          %s522 = sand.u32 %s38, 1
          %s523 = scalar_lea.sflag [#allocation6], %s522
          %s524 = sand.u32 %s114, 1
          %s525 = scalar_lea.vmem [#allocation7], %s524
          %s527 = ssub.s32 16, 16
          %528 = vsyncadd %s523, %s527
          %s529 = smul.addr %s45, 16
          %s530 = scalar_lea.hbm %s2, %s529
          %s532 = sshll.u32 %s525, 4
          %s533 = int_to_ptr.vmem [resolvable:$true] %s532
          %535 = dma.hbm_to_vmem [thread:$0]  %s530, 16, %s533, %s523
        $region52: #{tpu_custom_call.1} parent=39 // pred_fallthru
          _
        // Predicated region
        $region53: #{tpu_custom_call.1} parent=39 // pred_check
          %p536 = pneg %p150
        $region54: #{tpu_custom_call.1} parent=39 // pred_check_branch
          %538 = sbr.rel (%p536) target = $region56
        $region55: #{tpu_custom_call.1} parent=39 // pred_region
          %s539 = sand.u32 %s38, 1
          %s540 = scalar_lea.sflag [#allocation9], %s539
          %s541 = sand.u32 %s140, 1
          %s542 = smul.addr %s541, 8
          %s543 = scalar_lea.vmem [#allocation8], %s542
          %s544 = smul.u32 2, %s46
          %s546 = ssub.s32 128, 128
          %547 = vsyncadd %s540, %s546
          %s548 = smul.addr %s544, 64
          %s549 = scalar_lea.hbm %s3, %s548
          %s550 = sshll.u32 %s543, 4
          %s551 = int_to_ptr.vmem [resolvable:$true] %s550
          %556 = dma.hbm_to_vmem [thread:$0]  %s549, 128, %s551, %s540, 64, 64, 4
        $region56: #{tpu_custom_call.1} parent=39 // pred_fallthru
          _
        // Predicated region
        $region57: #{tpu_custom_call.1} parent=39 // pred_check
          %p557 = pneg %p176
        $region58: #{tpu_custom_call.1} parent=39 // pred_check_branch
          %559 = sbr.rel (%p557) target = $region60
        $region59: #{tpu_custom_call.1} parent=39 // pred_region
          %s560 = sand.u32 %s38, 1
          %s561 = scalar_lea.sflag [#allocation9], %s560
          %s562 = sand.u32 %s166, 1
          %s563 = smul.addr %s562, 8
          %s564 = scalar_lea.vmem [#allocation10], %s563
          %s565 = smul.u32 2, %s46
          %s567 = ssub.s32 128, 128
          %568 = vsyncadd %s561, %s567
          %s569 = smul.addr %s565, 64
          %s570 = scalar_lea.hbm %s4, %s569
          %s571 = sshll.u32 %s564, 4
          %s572 = int_to_ptr.vmem [resolvable:$true] %s571
          %577 = dma.hbm_to_vmem [thread:$0]  %s570, 128, %s572, %s561, 64, 64, 4
        $region60: #{tpu_custom_call.1} parent=39 // pred_fallthru
          _
      $region40: #{tpu_custom_call.1} parent=5 // pred_fallthru
        _
      %p578 = scmp.le.s32.totalorder 1, %s38
      %p579 = scmp.lt.s32.totalorder %s38, 5
      %p580 = pnand %p578, %p579
      %p581 = pneg %p580
      // Predicated region
      $region61: #{tpu_custom_call.1} parent=5 // pred_check
        _
      $region62: #{tpu_custom_call.1} parent=5 // pred_check_branch
        %583 = sbr.rel (%p580) target = $region64
      $region63: #{tpu_custom_call.1} parent=5 // pred_region
        %s584 = ssub.s32 %s38, 1
        %s585 = sand.u32 %s65, 1
        %s586 = scalar_lea.sflag [#allocation3], %s585
        %s587 = sand.u32 %s65, 1
        %s588 = smul.addr %s587, 16
        %s589 = scalar_lea.vmem [#allocation2], %s588
        // Predicated region
        $region65: #{tpu_custom_call.1} parent=63 // pred_check
          %p590 = pneg %p78
        $region66: #{tpu_custom_call.1} parent=63 // pred_check_branch
          %592 = sbr.rel (%p590) target = $region68
        $region67: #{tpu_custom_call.1} parent=63 // pred_region
          %593 = dma.done %s586, 256
        $region68: #{tpu_custom_call.1} parent=63 // pred_fallthru
          _
        %s594 = sand.u32 %s43, 1
        %s595 = scalar_lea.sflag [#allocation6], %s594
        %s596 = sand.u32 %s91, 1
        %s597 = scalar_lea.vmem [#allocation5], %s596
        // Predicated region
        $region69: #{tpu_custom_call.1} parent=63 // pred_check
          %p598 = pneg %p104
        $region70: #{tpu_custom_call.1} parent=63 // pred_check_branch
          %600 = sbr.rel (%p598) target = $region72
        $region71: #{tpu_custom_call.1} parent=63 // pred_region
          %601 = dma.done %s595, 16
        $region72: #{tpu_custom_call.1} parent=63 // pred_fallthru
          _
        %s602 = sand.u32 %s43, 1
        %s603 = scalar_lea.sflag [#allocation6], %s602
        %s604 = sand.u32 %s117, 1
        %s605 = scalar_lea.vmem [#allocation7], %s604
        // Predicated region
        $region73: #{tpu_custom_call.1} parent=63 // pred_check
          %p606 = pneg %p130
        $region74: #{tpu_custom_call.1} parent=63 // pred_check_branch
          %608 = sbr.rel (%p606) target = $region76
        $region75: #{tpu_custom_call.1} parent=63 // pred_region
          %609 = dma.done %s603, 16
        $region76: #{tpu_custom_call.1} parent=63 // pred_fallthru
          _
        %s610 = sand.u32 %s43, 1
        %s611 = scalar_lea.sflag [#allocation9], %s610
        %s612 = sand.u32 %s143, 1
        %s613 = smul.addr %s612, 8
        %s614 = scalar_lea.vmem [#allocation8], %s613
        // Predicated region
        $region77: #{tpu_custom_call.1} parent=63 // pred_check
          %p615 = pneg %p156
        $region78: #{tpu_custom_call.1} parent=63 // pred_check_branch
          %617 = sbr.rel (%p615) target = $region80
        $region79: #{tpu_custom_call.1} parent=63 // pred_region
          %618 = dma.done %s611, 128
        $region80: #{tpu_custom_call.1} parent=63 // pred_fallthru
          _
        %s619 = sand.u32 %s43, 1
        %s620 = scalar_lea.sflag [#allocation9], %s619
        %s621 = sand.u32 %s169, 1
        %s622 = smul.addr %s621, 8
        %s623 = scalar_lea.vmem [#allocation10], %s622
        // Predicated region
        $region81: #{tpu_custom_call.1} parent=63 // pred_check
          %p624 = pneg %p182
        $region82: #{tpu_custom_call.1} parent=63 // pred_check_branch
          %626 = sbr.rel (%p624) target = $region84
        $region83: #{tpu_custom_call.1} parent=63 // pred_region
          %627 = dma.done %s620, 128
        $region84: #{tpu_custom_call.1} parent=63 // pred_fallthru
          _
        // Predicated region
        $region85: #{tpu_custom_call.1} parent=63 // pred_check
          %p628 = pneg %p203
        $region86: #{tpu_custom_call.1} parent=63 // pred_check_branch
          %630 = sbr.rel (%p628) target = $region88
        $region87: #{tpu_custom_call.1} parent=63 // pred_region
          %631 = dma.done [#allocation12], 16
        $region88: #{tpu_custom_call.1} parent=63 // pred_fallthru
          _
        // Predicated region
        $region89: #{tpu_custom_call.1} parent=63 // pred_check
          %p632 = pneg %p224
        $region90: #{tpu_custom_call.1} parent=63 // pred_check_branch
          %634 = sbr.rel (%p632) target = $region92
        $region91: #{tpu_custom_call.1} parent=63 // pred_region
          %635 = dma.done [#allocation12], 16
        $region92: #{tpu_custom_call.1} parent=63 // pred_fallthru
          _
        // Predicated region
        $region93: #{tpu_custom_call.1} parent=63 // pred_check
          %p636 = pneg %p245
        $region94: #{tpu_custom_call.1} parent=63 // pred_check_branch
          %638 = sbr.rel (%p636) target = $region96
        $region95: #{tpu_custom_call.1} parent=63 // pred_region
          %639 = dma.done [#allocation15], 3072
        $region96: #{tpu_custom_call.1} parent=63 // pred_fallthru
          _
        // Predicated region
        $region97: #{tpu_custom_call.1} parent=63 // pred_check
          %p640 = pneg %p266
        $region98: #{tpu_custom_call.1} parent=63 // pred_check_branch
          %642 = sbr.rel (%p640) target = $region100
        $region99: #{tpu_custom_call.1} parent=63 // pred_region
          %643 = dma.done [#allocation15], 48
        $region100: #{tpu_custom_call.1} parent=63 // pred_fallthru
          _
        // Predicated region
        $region101: #{tpu_custom_call.1} parent=63 // pred_check
          %p644 = pneg %p287
        $region102: #{tpu_custom_call.1} parent=63 // pred_check_branch
          %646 = sbr.rel (%p644) target = $region104
        $region103: #{tpu_custom_call.1} parent=63 // pred_region
          %647 = dma.done [#allocation18], 16
        $region104: #{tpu_custom_call.1} parent=63 // pred_fallthru
          _
        // Predicated region
        $region105: #{tpu_custom_call.1} parent=63 // pred_check
          %p648 = pneg %p308
        $region106: #{tpu_custom_call.1} parent=63 // pred_check_branch
          %650 = sbr.rel (%p648) target = $region108
        $region107: #{tpu_custom_call.1} parent=63 // pred_region
          %651 = dma.done [#allocation18], 16
        $region108: #{tpu_custom_call.1} parent=63 // pred_fallthru
          _
        %s652 = sand.u32 %s65, 1
        %s653 = scalar_lea.sflag [#allocation3], %s652
        %s654 = sand.u32 %s65, 1
        %s655 = smul.addr %s654, 16
        %s656 = scalar_lea.vmem [#allocation2], %s655
        %p657 = pneg %p78
        %p658 = pneg %p75
        %s659 = sand.u32 %s43, 1
        %s660 = scalar_lea.sflag [#allocation6], %s659
        %s661 = sand.u32 %s91, 1
        %s662 = scalar_lea.vmem [#allocation5], %s661
        %p663 = pneg %p104
        %p664 = pneg %p101
        %s665 = sand.u32 %s43, 1
        %s666 = scalar_lea.sflag [#allocation6], %s665
        %s667 = sand.u32 %s117, 1
        %s668 = scalar_lea.vmem [#allocation7], %s667
        %p669 = pneg %p130
        %p670 = pneg %p127
        %s671 = sand.u32 %s43, 1
        %s672 = scalar_lea.sflag [#allocation9], %s671
        %s673 = sand.u32 %s143, 1
        %s674 = smul.addr %s673, 8
        %s675 = scalar_lea.vmem [#allocation8], %s674
        %p676 = pneg %p156
        %p677 = pneg %p153
        %s678 = sand.u32 %s43, 1
        %s679 = scalar_lea.sflag [#allocation9], %s678
        %s680 = sand.u32 %s169, 1
        %s681 = smul.addr %s680, 8
        %s682 = scalar_lea.vmem [#allocation10], %s681
        %p683 = pneg %p182
        %p684 = pneg %p179
        %p685 = pneg %p203
        %p686 = pneg %p200
        %p687 = pneg %p224
        %p688 = pneg %p221
        %p689 = pneg %p245
        %p690 = pneg %p242
        %p691 = pneg %p266
        %p692 = pneg %p263
        %p693 = pneg %p287
        %p694 = pneg %p284
        %p695 = pneg %p308
        %p696 = pneg %p305
        %p697 = pneg %p336
        %p698 = pneg %p333
        %s699 = sand.u32 %s323, 1
        %s700 = scalar_lea.sflag [#allocation4], %s699
        %s701 = sand.u32 %s323, 1
        %s702 = smul.addr %s701, 8
        %s703 = scalar_lea.vmem [#allocation20], %s702
        %p704 = pneg %p364
        %p705 = pneg %p361
        %s706 = sand.u32 %s43, 1
        %s707 = scalar_lea.sflag [#allocation22], %s706
        %s708 = sand.u32 %s351, 1
        %s709 = smul.addr %s708, 8
        %s710 = scalar_lea.vmem [#allocation21], %s709
        %p711 = pneg %p392
        %p712 = pneg %p389
        %s713 = sand.u32 %s43, 1
        %s714 = scalar_lea.sflag [#allocation22], %s713
        %s715 = sand.u32 %s379, 1
        %s716 = smul.addr %s715, 8
        %s717 = scalar_lea.vmem [#allocation23], %s716
        %s718 = smul.u32 2, %s48
        %s719 = smul.u32 2, %s48
        %s720 = smul.u32 2, %s48
        %s721 = smul.u32 2, %s48
        %s722 = smul.u32 2, %s48
        %s723 = smul.u32 2, %s48
        %v725 = vld [vmem:[%s589] sm:$0xff]
        %v726 = vld [vmem:[%s589 + $0x8] sm:$0xff]
        %v727 = vld [vmem:[#allocation11] sm:$0x1]
        %v728 = vld [vmem:[#allocation13] sm:$0x1]
        %729 = vadd.xlane.f32.xlu0 %v725
        %v730 = vpop.xlane.xlu0 %729
        %731 = vadd.xlane.f32.xlu0 %v726
        %v732 = vpop.xlane.xlu0 %731
        %v733 = vrcp.pop 128.0
        %v734 = vmul.f32 %v730, %v733
        %v735 = vmul.f32 %v732, %v733
        %v736 = vsub.f32 %v725, %v734
        %v737 = vsub.f32 %v726, %v735
        %v738 = vmul.f32 %v736, %v736
        %v739 = vmul.f32 %v737, %v737
        %740 = vadd.xlane.f32.xlu0 %v738
        %v741 = vpop.xlane.xlu0 %740
        %742 = vadd.xlane.f32.xlu0 %v739
        %v743 = vpop.xlane.xlu0 %742
        %v744 = vmul.f32 %v741, %v733
        %v745 = vmul.f32 %v743, %v733
        %v746 = vadd.f32 %v744, 1e-05
        %v747 = vadd.f32 %v745, 1e-05
        %v748 = vrsqrt.pop %v746
        %v749 = vrsqrt.pop %v747
        %v750 = vmul.f32 %v736, %v748
        %v751 = vmul.f32 %v737, %v749
        %v753 = vlaneseq
        %v754 = vshrl.u32 %v753, 7
        %v755 = vsub.s32 0, %v754
        %v756 = vrot.slane %v727, %v755
        %v758 = vmul.f32 %v750, %v756
        %v759 = vmul.f32 %v751, %v756
        %v761 = vlaneseq
        %v762 = vshrl.u32 %v761, 7
        %v763 = vsub.s32 0, %v762
        %v764 = vrot.slane %v728, %v763
        %v766 = vadd.f32 %v758, %v764
        %v767 = vadd.f32 %v759, %v764
        %v768 = vld [vmem:[%s605] sm:$0x1]
        %v769 = vadd.f32 %v768, 1.0
        %v771 = vlaneseq
        %v772 = vshrl.u32 %v771, 7
        %v773 = vsub.s32 0, %v772
        %v774 = vrot.slane %v769, %v773
        %v776 = vmul.f32 %v766, %v774
        %v777 = vmul.f32 %v767, %v774
        %v778 = vld [vmem:[%s597] sm:$0x1]
        %v780 = vlaneseq
        %v781 = vshrl.u32 %v780, 7
        %v782 = vsub.s32 0, %v781
        %v783 = vrot.slane %v778, %v782
        %v785 = vadd.f32 %v776, %v783
        %v786 = vadd.f32 %v777, %v783
        %v787 = vpack.c.bf16 %v786, %v785
        %v788 = vld [vmem:[#allocation14] sm:$0xff]
        %v789 = vld [vmem:[#allocation14 + $0x8] sm:$0xf]
        %v790 = vld [vmem:[#allocation14 + $0xc] sm:$0xff]
        %v791 = vld [vmem:[#allocation14 + $0x14] sm:$0xf]
        %v792 = vld [vmem:[#allocation14 + $0x18] sm:$0xff]
        %v793 = vld [vmem:[#allocation14 + $0x20] sm:$0xf]
        %v794 = vld [vmem:[#allocation14 + $0x24] sm:$0xff]
        %v795 = vld [vmem:[#allocation14 + $0x2c] sm:$0xf]
        %v796 = vld [vmem:[#allocation14 + $0x30] sm:$0xff]
        %v797 = vld [vmem:[#allocation14 + $0x38] sm:$0xf]
        %v798 = vld [vmem:[#allocation14 + $0x3c] sm:$0xff]
        %v799 = vld [vmem:[#allocation14 + $0x44] sm:$0xf]
        %v800 = vld [vmem:[#allocation14 + $0x48] sm:$0xff]
        %v801 = vld [vmem:[#allocation14 + $0x50] sm:$0xf]
        %v802 = vld [vmem:[#allocation14 + $0x54] sm:$0xff]
        %v803 = vld [vmem:[#allocation14 + $0x5c] sm:$0xf]
        %v804 = vld [vmem:[#allocation14 + $0x60] sm:$0xff]
        %v805 = vld [vmem:[#allocation14 + $0x68] sm:$0xf]
        %v806 = vld [vmem:[#allocation14 + $0x6c] sm:$0xff]
        %v807 = vld [vmem:[#allocation14 + $0x74] sm:$0xf]
        %v808 = vld [vmem:[#allocation14 + $0x78] sm:$0xff]
        %v809 = vld [vmem:[#allocation14 + $0x80] sm:$0xf]
        %v810 = vld [vmem:[#allocation14 + $0x84] sm:$0xff]
        %v811 = vld [vmem:[#allocation14 + $0x8c] sm:$0xf]
        %v812 = vld [vmem:[#allocation14 + $0x90] sm:$0xff]
        %v813 = vld [vmem:[#allocation14 + $0x98] sm:$0xf]
        %v814 = vld [vmem:[#allocation14 + $0x9c] sm:$0xff]
        %v815 = vld [vmem:[#allocation14 + $0xa4] sm:$0xf]
        %v816 = vld [vmem:[#allocation14 + $0xa8] sm:$0xff]
        %v817 = vld [vmem:[#allocation14 + $0xb0] sm:$0xf]
        %v818 = vld [vmem:[#allocation14 + $0xb4] sm:$0xff]
        %v819 = vld [vmem:[#allocation14 + $0xbc] sm:$0xf]
        %v820 = vld [vmem:[#allocation16] sm:$0x7]
        %v822 = vlaneseq
        %v823 = vshrl.u32 %v822, 7
        %v824 = vsub.s32 0, %v823
        %v825 = vrot.slane %v820, %v824
        %v826 = vlaneseq
        %v827 = vshrl.u32 %v826, 7
        %v828 = vsub.s32 1, %v827
        %v829 = vrot.slane %v820, %v828
        %v830 = vlaneseq
        %v831 = vshrl.u32 %v830, 7
        %v832 = vsub.s32 2, %v831
        %v833 = vrot.slane %v820, %v832
        %v869 = vunpack.c.l.b16 %v788
        %v870 = vunpack.c.h.b16 %v788
        %v871 = vunpack.c.l.b16 %v789
        %v872 = vunpack.c.l.b16 %v790
        %v873 = vunpack.c.h.b16 %v790
        %v874 = vunpack.c.l.b16 %v791
        %v875 = vunpack.c.l.b16 %v792
        %v876 = vunpack.c.h.b16 %v792
        %v877 = vunpack.c.l.b16 %v793
        %v878 = vunpack.c.l.b16 %v794
        %v879 = vunpack.c.h.b16 %v794
        %v880 = vunpack.c.l.b16 %v795
        %v881 = vunpack.c.l.b16 %v796
        %v882 = vunpack.c.h.b16 %v796
        %v883 = vunpack.c.l.b16 %v797
        %v884 = vunpack.c.l.b16 %v798
        %v885 = vunpack.c.h.b16 %v798
        %v886 = vunpack.c.l.b16 %v799
        %v887 = vunpack.c.l.b16 %v800
        %v888 = vunpack.c.h.b16 %v800
        %v889 = vunpack.c.l.b16 %v801
        %v890 = vunpack.c.l.b16 %v802
        %v891 = vunpack.c.h.b16 %v802
        %v892 = vunpack.c.l.b16 %v803
        %v893 = vunpack.c.l.b16 %v804
        %v894 = vunpack.c.h.b16 %v804
        %v895 = vunpack.c.l.b16 %v805
        %v896 = vunpack.c.l.b16 %v806
        %v897 = vunpack.c.h.b16 %v806
        %v898 = vunpack.c.l.b16 %v807
        %v899 = vunpack.c.l.b16 %v808
        %v900 = vunpack.c.h.b16 %v808
        %v901 = vunpack.c.l.b16 %v809
        %v902 = vunpack.c.l.b16 %v810
        %v903 = vunpack.c.h.b16 %v810
        %v904 = vunpack.c.l.b16 %v811
        %v905 = vunpack.c.l.b16 %v812
        %v906 = vunpack.c.h.b16 %v812
        %v907 = vunpack.c.l.b16 %v813
        %v908 = vunpack.c.l.b16 %v814
        %v909 = vunpack.c.h.b16 %v814
        %v910 = vunpack.c.l.b16 %v815
        %v911 = vunpack.c.l.b16 %v816
        %v912 = vunpack.c.h.b16 %v816
        %v913 = vunpack.c.l.b16 %v817
        %v914 = vunpack.c.l.b16 %v818
        %v915 = vunpack.c.h.b16 %v818
        %v916 = vunpack.c.l.b16 %v819
        %v917 = vpack.c.b16 %v872, %v869
        %v918 = vpack.c.b16 %v873, %v870
        %v919 = vpack.c.b16 %v874, %v871
        %v920 = vpack.c.b16 %v878, %v875
        %v921 = vpack.c.b16 %v879, %v876
        %v922 = vpack.c.b16 %v880, %v877
        %v923 = vpack.c.b16 %v884, %v881
        %v924 = vpack.c.b16 %v885, %v882
        %v925 = vpack.c.b16 %v886, %v883
        %v926 = vpack.c.b16 %v890, %v887
        %v927 = vpack.c.b16 %v891, %v888
        %v928 = vpack.c.b16 %v892, %v889
        %v929 = vpack.c.b16 %v896, %v893
        %v930 = vpack.c.b16 %v897, %v894
        %v931 = vpack.c.b16 %v898, %v895
        %v932 = vpack.c.b16 %v902, %v899
        %v933 = vpack.c.b16 %v903, %v900
        %v934 = vpack.c.b16 %v904, %v901
        %v935 = vpack.c.b16 %v908, %v905
        %v936 = vpack.c.b16 %v909, %v906
        %v937 = vpack.c.b16 %v910, %v907
        %v938 = vpack.c.b16 %v914, %v911
        %v939 = vpack.c.b16 %v915, %v912
        %v940 = vpack.c.b16 %v916, %v913
        %965 = vmatprep.subr.bf16.mxu0 %v918
        %966 = vmatpush1.bf16.msra.mxu0 %v917
        %967 = vmatprep.subr.bf16.mxu0 %v921
        %968 = vmatpush1.bf16.msra.mxu0 %v920
        %969 = vmatprep.subr.bf16.mxu0 %v924
        %970 = vmatpush1.bf16.msra.mxu0 %v923
        %971 = vmatprep.subr.bf16.mxu0 %v927
        %972 = vmatpush1.bf16.msra.mxu0 %v926
        %973 = vmatprep.subr.bf16.mxu0 %v930
        %974 = vmatpush1.bf16.msra.mxu0 %v929
        %975 = vmatprep.subr.bf16.mxu0 %v933
        %976 = vmatpush1.bf16.msra.mxu0 %v932
        %977 = vmatprep.subr.bf16.mxu0 %v936
        %978 = vmatpush1.bf16.msra.mxu0 %v935
        %979 = vmatprep.subr.bf16.mxu0 %v939
        %980 = vmatpush1.bf16.msra.mxu0 %v938
        %981 = vmatprep.subr.bf16.mxu0 0
        %982 = vmatpush1.bf16.msra.mxu0 0
        %983 = vmatprep.subr.bf16.mxu0 0
        %984 = vmatpush1.bf16.msra.mxu0 0
        %985 = vmatprep.subr.bf16.mxu0 0
        %986 = vmatpush1.bf16.msra.mxu0 0
        %987 = vmatprep.subr.bf16.mxu0 0
        %988 = vmatpush1.bf16.msra.mxu0 0
        %989 = vmatprep.subr.bf16.mxu0 0
        %990 = vmatpush1.bf16.msra.mxu0 0
        %991 = vmatprep.subr.bf16.mxu0 0
        %992 = vmatpush1.bf16.msra.mxu0 0
        %993 = vmatprep.subr.bf16.mxu0 0
        %994 = vmatpush1.bf16.msra.mxu0 0
        %995 = vmatprep.subr.bf16.mxu0 0
        %996 = vmatpush1.bf16.msra.mxu0 0
        %997 = vmatprep.mubr.bf16.mxu0 0
        %998 = vmatmul.mubr.bf16.gmra.mrb[0].mxu0 %v787
        %v999 = vpop.f32.mrb[0].mxu0
        %v1000 = vadd.f32 %v825, %v999
        %v1001 = vpop.f32.mrb[0].mxu0
        %v1002 = vadd.f32 %v829, %v1001
        %v1003 = vpop.f32.mrb[0].mxu0
        %v1004 = vadd.f32 %v825, %v1003
        %v1005 = vpop.f32.mrb[0].mxu0
        %v1006 = vadd.f32 %v829, %v1005
        %1007 = vdwg.mxu0
        %1008 = vmatprep.subr.bf16.mxu0 0
        %1009 = vmatpush1.bf16.msra.mxu0 %v919
        %1010 = vmatprep.subr.bf16.mxu0 0
        %1011 = vmatpush1.bf16.msra.mxu0 %v922
        %1012 = vmatprep.subr.bf16.mxu0 0
        %1013 = vmatpush1.bf16.msra.mxu0 %v925
        %1014 = vmatprep.subr.bf16.mxu0 0
        %1015 = vmatpush1.bf16.msra.mxu0 %v928
        %1016 = vmatprep.subr.bf16.mxu0 0
        %1017 = vmatpush1.bf16.msra.mxu0 %v931
        %1018 = vmatprep.subr.bf16.mxu0 0
        %1019 = vmatpush1.bf16.msra.mxu0 %v934
        %1020 = vmatprep.subr.bf16.mxu0 0
        %1021 = vmatpush1.bf16.msra.mxu0 %v937
        %1022 = vmatprep.subr.bf16.mxu0 0
        %1023 = vmatpush1.bf16.msra.mxu0 %v940
        %1024 = vmatprep.subr.bf16.mxu0 0
        %1025 = vmatpush1.bf16.msra.mxu0 0
        %1026 = vmatprep.subr.bf16.mxu0 0
        %1027 = vmatpush1.bf16.msra.mxu0 0
        %1028 = vmatprep.subr.bf16.mxu0 0
        %1029 = vmatpush1.bf16.msra.mxu0 0
        %1030 = vmatprep.subr.bf16.mxu0 0
        %1031 = vmatpush1.bf16.msra.mxu0 0
        %1032 = vmatprep.subr.bf16.mxu0 0
        %1033 = vmatpush1.bf16.msra.mxu0 0
        %1034 = vmatprep.subr.bf16.mxu0 0
        %1035 = vmatpush1.bf16.msra.mxu0 0
        %1036 = vmatprep.subr.bf16.mxu0 0
        %1037 = vmatpush1.bf16.msra.mxu0 0
        %1038 = vmatprep.subr.bf16.mxu0 0
        %1039 = vmatpush1.bf16.msra.mxu0 0
        %1040 = vmatprep.mubr.bf16.mxu0 0
        %1041 = vmatmul.mubr.bf16.gmra.mrb[0].mxu0 %v787
        %v1042 = vpop.f32.mrb[0].mxu0
        %v1043 = vadd.f32 %v833, %v1042
        %v1044 = vpop.f32.mrb[0].mxu0
        %v1045 = vpop.f32.mrb[0].mxu0
        %v1046 = vadd.f32 %v833, %v1045
        %v1047 = vpop.f32.mrb[0].mxu0
        %1048 = vdwg.mxu0
        %v1049 = vld [vmem:[#allocation17] sm:$0x1]
        %v1050 = vmul.f32 %v1000, %v1000
        %v1051 = vmul.f32 %v1004, %v1004
        %1052 = vadd.xlane.f32.xlu0 %v1050
        %v1053 = vpop.xlane.xlu0 %1052
        %1054 = vadd.xlane.f32.xlu0 %v1051
        %v1055 = vpop.xlane.xlu0 %1054
        %v1056 = vmul.f32 %v1053, %v733
        %v1057 = vmul.f32 %v1055, %v733
        %v1058 = vadd.f32 %v1056, 1e-06
        %v1059 = vadd.f32 %v1057, 1e-06
        %v1060 = vrsqrt.pop %v1058
        %v1061 = vrsqrt.pop %v1059
        %v1062 = vmul.f32 %v1000, %v1060
        %v1063 = vmul.f32 %v1004, %v1061
        %v1065 = vlaneseq
        %v1066 = vshrl.u32 %v1065, 7
        %v1067 = vsub.s32 0, %v1066
        %v1068 = vrot.slane %v1049, %v1067
        %v1070 = vmul.f32 %v1062, %v1068
        %v1071 = vmul.f32 %v1063, %v1068
        %v1072 = vld [vmem:[#allocation19] sm:$0x1]
        %v1073 = vmul.f32 %v1002, %v1002
        %v1074 = vmul.f32 %v1006, %v1006
        %1075 = vadd.xlane.f32.xlu0 %v1073
        %v1076 = vpop.xlane.xlu0 %1075
        %1077 = vadd.xlane.f32.xlu0 %v1074
        %v1078 = vpop.xlane.xlu0 %1077
        %v1079 = vmul.f32 %v1076, %v733
        %v1080 = vmul.f32 %v1078, %v733
        %v1081 = vadd.f32 %v1079, 1e-06
        %v1082 = vadd.f32 %v1080, 1e-06
        %v1083 = vrsqrt.pop %v1081
        %v1084 = vrsqrt.pop %v1082
        %v1085 = vmul.f32 %v1002, %v1083
        %v1086 = vmul.f32 %v1006, %v1084
        %v1088 = vlaneseq
        %v1089 = vshrl.u32 %v1088, 7
        %v1090 = vsub.s32 0, %v1089
        %v1091 = vrot.slane %v1072, %v1090
        %v1093 = vmul.f32 %v1085, %v1091
        %v1094 = vmul.f32 %v1086, %v1091
        %v1095 = vld [vmem:[%s614] sm:$0xf]
        %v1096 = vld [vmem:[%s614 + $0x4] sm:$0xf]
        %v1097 = vunpack.c.l.bf16 %v1095
        %v1098 = vunpack.c.l.bf16 %v1096
        %v1099 = vld [vmem:[%s623] sm:$0xf]
        %v1100 = vld [vmem:[%s623 + $0x4] sm:$0xf]
        %v1101 = vunpack.c.l.bf16 %v1099
        %v1102 = vunpack.c.l.bf16 %v1100
        %1105 = vrot.lane.b32.xlu0 %v1097, 64
        %v1106 = vpop.permute.xlu0 %1105
        %1107 = vrot.lane.b32.xlu0 %v1098, 64
        %v1108 = vpop.permute.xlu0 %1107
        %vm1111 = vcmask 523264
        %v1112 = vsel %vm1111, %v1097, %v1106
        %v1113 = vsel %vm1111, %v1098, %v1108
        %v1114 = vsub.f32 0.0, %v1101
        %v1115 = vsub.f32 0.0, %v1102
        %1118 = vrot.lane.b32.xlu0 %v1101, 64
        %v1119 = vpop.permute.xlu0 %1118
        %1120 = vrot.lane.b32.xlu0 %v1102, 64
        %v1121 = vpop.permute.xlu0 %1120
        %v1124 = vsel %vm1111, %v1114, %v1119
        %v1125 = vsel %vm1111, %v1115, %v1121
        %v1126 = vmul.f32 %v1070, %v1112
        %v1127 = vmul.f32 %v1071, %v1113
        %1128 = vrot.lane.b32.xlu0 %v1070, 64
        %v1129 = vpop.permute.xlu0 %1128
        %1130 = vrot.lane.b32.xlu0 %v1071, 64
        %v1131 = vpop.permute.xlu0 %1130
        %v1132 = vmul.f32 %v1129, %v1124
        %v1133 = vmul.f32 %v1131, %v1125
        %v1134 = vadd.f32 %v1126, %v1132
        %v1135 = vadd.f32 %v1127, %v1133
        %v1136 = vmul.f32 %v1093, %v1112
        %v1137 = vmul.f32 %v1094, %v1113
        %1138 = vrot.lane.b32.xlu0 %v1093, 64
        %v1139 = vpop.permute.xlu0 %1138
        %1140 = vrot.lane.b32.xlu0 %v1094, 64
        %v1141 = vpop.permute.xlu0 %1140
        %v1142 = vmul.f32 %v1139, %v1124
        %v1143 = vmul.f32 %v1141, %v1125
        %v1144 = vadd.f32 %v1136, %v1142
        %v1145 = vadd.f32 %v1137, %v1143
        %v1146 = vmul.f32 %v1134, 0.17677669
        %v1147 = vmul.f32 %v1135, 0.17677669
        %v1148 = vpack.c.bf16 %v1147, %v1146
        %v1150 = vunpack.c.l.b16 %v1148
        %v1151 = vunpack.c.h.b16 %v1148
        %v1152 = vpack.c.b16 %v1150, %v1150
        %v1153 = vpack.c.b16 %v1151, %v1151
        %1156 = vst [vmem:[%s703] sm:$0xf] %v1152
        %1157 = vst [vmem:[%s703 + $0x4] sm:$0xf] %v1153
        %v1158 = vpack.c.bf16 %v1145, %v1144
        %v1160 = vunpack.c.l.b16 %v1158
        %v1161 = vunpack.c.h.b16 %v1158
        %v1162 = vpack.c.b16 %v1160, %v1160
        %v1163 = vpack.c.b16 %v1161, %v1161
        %1166 = vst [vmem:[%s710] sm:$0xf] %v1162
        %1167 = vst [vmem:[%s710 + $0x4] sm:$0xf] %v1163
        %v1168 = vpack.c.bf16 %v1046, %v1043
        %v1170 = vunpack.c.l.b16 %v1168
        %v1171 = vunpack.c.h.b16 %v1168
        %v1172 = vpack.c.b16 %v1170, %v1170
        %v1173 = vpack.c.b16 %v1171, %v1171
        %1176 = vst [vmem:[%s717] sm:$0xf] %v1172
        %1177 = vst [vmem:[%s717 + $0x4] sm:$0xf] %v1173
        %s1178 = sand.u32 %s323, 1
        %s1179 = scalar_lea.sflag [#allocation4], %s1178
        %s1180 = sand.u32 %s323, 1
        %s1181 = smul.addr %s1180, 8
        %s1182 = scalar_lea.vmem [#allocation20], %s1181
        %s1183 = sand.u32 %s43, 1
        %s1184 = scalar_lea.sflag [#allocation22], %s1183
        %s1185 = sand.u32 %s351, 1
        %s1186 = smul.addr %s1185, 8
        %s1187 = scalar_lea.vmem [#allocation21], %s1186
        %s1188 = sand.u32 %s43, 1
        %s1189 = scalar_lea.sflag [#allocation22], %s1188
        %s1190 = sand.u32 %s379, 1
        %s1191 = smul.addr %s1190, 8
        %s1192 = scalar_lea.vmem [#allocation23], %s1191
        // Predicated region
        $region109: #{tpu_custom_call.1} parent=63 // pred_check
          %p1193 = pneg %p333
        $region110: #{tpu_custom_call.1} parent=63 // pred_check_branch
          %1195 = sbr.rel (%p1193) target = $region112
        $region111: #{tpu_custom_call.1} parent=63 // pred_region
          %s1196 = smul.u32 2, %s48
          %s1198 = ssub.s32 128, 128
          %1199 = vsyncadd %s1179, %s1198
          %s1200 = smul.addr %s47, 4
          %s1201 = sadd.s32 %s1196, %s1200
          %s1202 = smul.addr %s1201, 64
          %s1203 = scalar_lea.hbm %s11, %s1202
          %s1204 = sshll.u32 %s1182, 4
          %s1205 = int_to_ptr.vmem [resolvable:$true] %s1204
          %1210 = dma.vmem_to_hbm [thread:$0]  %s1205, 128, %s1203, %s1179, 64, 64, 4
        $region112: #{tpu_custom_call.1} parent=63 // pred_fallthru
          _
        // Predicated region
        $region113: #{tpu_custom_call.1} parent=63 // pred_check
          %p1211 = pneg %p361
        $region114: #{tpu_custom_call.1} parent=63 // pred_check_branch
          %1213 = sbr.rel (%p1211) target = $region116
        $region115: #{tpu_custom_call.1} parent=63 // pred_region
          %s1214 = smul.u32 2, %s48
          %s1216 = ssub.s32 128, 128
          %1217 = vsyncadd %s1184, %s1216
          %s1218 = smul.addr %s47, 4
          %s1219 = sadd.s32 %s1214, %s1218
          %s1220 = smul.addr %s1219, 64
          %s1221 = scalar_lea.hbm %s12, %s1220
          %s1222 = sshll.u32 %s1187, 4
          %s1223 = int_to_ptr.vmem [resolvable:$true] %s1222
          %1228 = dma.vmem_to_hbm [thread:$0]  %s1223, 128, %s1221, %s1184, 64, 64, 4
        $region116: #{tpu_custom_call.1} parent=63 // pred_fallthru
          _
        // Predicated region
        $region117: #{tpu_custom_call.1} parent=63 // pred_check
          %p1229 = pneg %p389
        $region118: #{tpu_custom_call.1} parent=63 // pred_check_branch
          %1231 = sbr.rel (%p1229) target = $region120
        $region119: #{tpu_custom_call.1} parent=63 // pred_region
          %s1232 = smul.u32 2, %s48
          %s1234 = ssub.s32 128, 128
          %1235 = vsyncadd %s1189, %s1234
          %s1236 = smul.addr %s47, 4
          %s1237 = sadd.s32 %s1232, %s1236
          %s1238 = smul.addr %s1237, 64
          %s1239 = scalar_lea.hbm %s13, %s1238
          %s1240 = sshll.u32 %s1192, 4
          %s1241 = int_to_ptr.vmem [resolvable:$true] %s1240
          %1246 = dma.vmem_to_hbm [thread:$0]  %s1241, 128, %s1239, %s1189, 64, 64, 4
        $region120: #{tpu_custom_call.1} parent=63 // pred_fallthru
          _
      $region64: #{tpu_custom_call.1} parent=5 // pred_fallthru
        _
      %p1247 = scmp.le.s32.totalorder 2, %s38
      // Predicated region
      $region121: #{tpu_custom_call.1} parent=5 // pred_check
        %p1248 = pneg %p1247
      $region122: #{tpu_custom_call.1} parent=5 // pred_check_branch
        %1250 = sbr.rel (%p1248) target = $region124
      $region123: #{tpu_custom_call.1} parent=5 // pred_region
        %s1251 = ssub.s32 %s38, 2
        // Predicated region
        $region125: #{tpu_custom_call.1} parent=123 // pred_check
          %p1252 = pneg %p339
        $region126: #{tpu_custom_call.1} parent=123 // pred_check_branch
          %1254 = sbr.rel (%p1252) target = $region128
        $region127: #{tpu_custom_call.1} parent=123 // pred_region
          %s1255 = sand.u32 %s324, 1
          %s1256 = scalar_lea.sflag [#allocation4], %s1255
          %s1257 = sand.u32 %s324, 1
          %s1258 = smul.addr %s1257, 8
          %s1259 = scalar_lea.vmem [#allocation20], %s1258
          %1260 = dma.done %s1256, 128
        $region128: #{tpu_custom_call.1} parent=123 // pred_fallthru
          _
        // Predicated region
        $region129: #{tpu_custom_call.1} parent=123 // pred_check
          %p1261 = pneg %p367
        $region130: #{tpu_custom_call.1} parent=123 // pred_check_branch
          %1263 = sbr.rel (%p1261) target = $region132
        $region131: #{tpu_custom_call.1} parent=123 // pred_region
          %s1264 = sand.u32 %s44, 1
          %s1265 = scalar_lea.sflag [#allocation22], %s1264
          %s1266 = sand.u32 %s352, 1
          %s1267 = smul.addr %s1266, 8
          %s1268 = scalar_lea.vmem [#allocation21], %s1267
          %1269 = dma.done %s1265, 128
        $region132: #{tpu_custom_call.1} parent=123 // pred_fallthru
          _
        // Predicated region
        $region133: #{tpu_custom_call.1} parent=123 // pred_check
          %p1270 = pneg %p395
        $region134: #{tpu_custom_call.1} parent=123 // pred_check_branch
          %1272 = sbr.rel (%p1270) target = $region136
        $region135: #{tpu_custom_call.1} parent=123 // pred_region
          %s1273 = sand.u32 %s44, 1
          %s1274 = scalar_lea.sflag [#allocation22], %s1273
          %s1275 = sand.u32 %s380, 1
          %s1276 = smul.addr %s1275, 8
          %s1277 = scalar_lea.vmem [#allocation23], %s1276
          %1278 = dma.done %s1274, 128
        $region136: #{tpu_custom_call.1} parent=123 // pred_fallthru
          _
      $region124: #{tpu_custom_call.1} parent=5 // pred_fallthru
        _
    $region6: #{tpu_custom_call.1} parent=1 // loop_footer
      %s42 = sadd.s32 1, %s38
    $region7: #{tpu_custom_call.1} parent=1 // loop_footer_branch
      %37 = sbr.rel target = $region3
    $region8: #{tpu_custom_call.1} parent=1 // loop_exit
      _
    %1279 = vsyncpa [#allocation3], 1
    %s1280 = scalar_lea.sflag [#allocation3], 1
    %1281 = vsyncpa %s1280, 1
    %1282 = vsyncpa [#allocation6], 1
    %s1283 = scalar_lea.sflag [#allocation6], 1
    %1284 = vsyncpa %s1283, 1
    %1285 = vsyncpa [#allocation9], 1
    %s1286 = scalar_lea.sflag [#allocation9], 1
    %1287 = vsyncpa %s1286, 1
    %1288 = vsyncpa [#allocation12], 1
    %1289 = vsyncpa [#allocation15], 1
    %1290 = vsyncpa [#allocation18], 1
    %1291 = vsyncpa [#allocation4], 1
    %s1292 = scalar_lea.sflag [#allocation4], 1
    %1293 = vsyncpa %s1292, 1
    %1294 = vsyncpa [#allocation22], 1
    %s1295 = scalar_lea.sflag [#allocation22], 1
    %1296 = vsyncpa %s1295, 1

</llo_original>
